<compile_context>
chip_gen: v5e
topology: v5e:2x2
jax: 0.10.0
libtpu: 0.0.40
codegen_flags: <defaults>
</compile_context>

<pallas_src>
import functools

import jax
import jax.numpy as jnp
from jax.experimental import pallas as pl
from jax.experimental.pallas import tpu as pltpu

N_OBSERVATION = 9
HIDDEN_NUMBER = 128
N_ACTIONS = 5
A_PAD = 8            # padded action rows (one sublane group); lane axis carries batch
MAX_TB = 512         # cap on the batch (lane) tile; multiple of 128


def _round_up(x, m):
    return ((x + m - 1) // m) * m


def _net_kernel(xT_ref, w1T_ref, b1T_ref, w2T_ref, b2T_ref, outT_ref):
    # xT_ref:  [9, tb]        (batch on lanes)
    # w1T_ref: [128, 9]       b1T_ref: [128, 1]
    # w2T_ref: [8, 128]       b2T_ref: [8, 1]
    # outT_ref:[8, tb]
    xT = xT_ref[...]
    w1T = w1T_ref[...]
    tb = xT.shape[1]

    # fc1 on the VPU: K = 9, so 9 broadcast multiply-accumulates instead of a
    # >90%-padded MXU matmul.  b1 seeds the accumulator (no extra add pass).
    h = jnp.broadcast_to(b1T_ref[...], (HIDDEN_NUMBER, tb))
    for k in range(N_OBSERVATION):  # static unroll, K = 9
        h = h + w1T[:, k:k + 1] * xT[k:k + 1, :]

    # ReLU
    h = jnp.maximum(h, 0.0)

    # out layer on the MXU: [8, 128] @ [128, tb], f32 accumulate, lane-dense store.
    y = jnp.dot(w2T_ref[...], h, preferred_element_type=jnp.float32)
    outT_ref[...] = (y + b2T_ref[...]).astype(outT_ref.dtype)


def prepare_params(w1, b1, w2, b2):
    """One-time packing of parameters into the kernel layout (do NOT call per step).

    w1: [N_OBS, HIDDEN], b1: [1, HIDDEN] or [HIDDEN],
    w2: [HIDDEN, N_ACTIONS], b2: [1, N_ACTIONS] or [N_ACTIONS]  (all [in, out]).
    """
    A = w2.shape[1]
    w1T = jnp.asarray(w1).T.astype(jnp.float32)                       # [128, 9]
    b1T = jnp.asarray(b1).reshape(HIDDEN_NUMBER, 1).astype(jnp.float32)
    w2T = jnp.zeros((A_PAD, HIDDEN_NUMBER), jnp.float32).at[:A, :].set(
        jnp.asarray(w2).T.astype(jnp.float32))                        # [8, 128]
    b2T = jnp.zeros((A_PAD, 1), jnp.float32).at[:A, :].set(
        jnp.asarray(b2).reshape(A, 1).astype(jnp.float32))            # [8, 1]
    return w1T, b1T, w2T, b2T


@functools.partial(jax.jit, static_argnames=("n_actions",))
def net_forward(x, w1T, b1T, w2T, b2T, *, n_actions=N_ACTIONS):
    """x: [B, N_OBSERVATION] f32 -> [B, n_actions] f32 via the Pallas TPU kernel.

    Params must be pre-packed with prepare_params().  For tiny single-step
    action-selection batches (B <= ~32) prefer net_forward_xla - a Pallas call is
    pure launch overhead at that size.
    """
    B = x.shape[0]

    # Batch lives on the lane axis: tile must be a multiple of 128.  Use the
    # smallest legal tile for small batches, cap at MAX_TB for big replay batches.
    tb = MAX_TB if B > MAX_TB else _round_up(B, 128)
    num_tiles = -(-B // tb)
    Bp = num_tiles * tb

    # Transposed, lane-dense input: [9, Bp] (contiguous 4*tb-byte DMA rows).
    xT = x.astype(jnp.float32).T
    if Bp != B:
        xT = jnp.pad(xT, ((0, 0), (0, Bp - B)))

    # Megacore split only when it divides evenly across 2 TensorCores (v7x);
    # no-op on single-TC v5e/v6e.
    semantics = ("parallel",) if (num_tiles >= 2 and num_tiles % 2 == 0) else ("arbitrary",)

    itemsize = 4
    cost = pl.CostEstimate(
        flops=2 * B * (N_OBSERVATION * HIDDEN_NUMBER + HIDDEN_NUMBER * n_actions),
        transcendentals=0,
        bytes_accessed=(Bp * (N_OBSERVATION + A_PAD)
                        + w1T.size + b1T.size + w2T.size + b2T.size) * itemsize,
    )

    outT = pl.pallas_call(
        _net_kernel,
        out_shape=jax.ShapeDtypeStruct((A_PAD, Bp), jnp.float32),
        grid=(num_tiles,),
        in_specs=[
            pl.BlockSpec((N_OBSERVATION, tb), lambda i: (0, i)),           # streamed xT
            pl.BlockSpec((HIDDEN_NUMBER, N_OBSERVATION), lambda i: (0, 0)),  # resident w1T
            pl.BlockSpec((HIDDEN_NUMBER, 1), lambda i: (0, 0)),            # resident b1T
            pl.BlockSpec((A_PAD, HIDDEN_NUMBER), lambda i: (0, 0)),        # resident w2T
            pl.BlockSpec((A_PAD, 1), lambda i: (0, 0)),                    # resident b2T
        ],
        out_specs=pl.BlockSpec((A_PAD, tb), lambda i: (0, i)),
        compiler_params=pltpu.CompilerParams(dimension_semantics=semantics),
        cost_estimate=cost,
    )(xT, w1T, b1T, w2T, b2T)

    # Back to the module's [B, N_ACTIONS] layout (only 5 x B elements touched).
    return outT[:n_actions, :B].T


def net_forward_xla(x, w1, b1, w2, b2):
    """Plain-JAX reference / fallback for tiny batches (same math as the module)."""
    return jnp.maximum(x @ w1 + b1, 0.0) @ w2 + b2


def init_params(key):
    """Synthetic init mirroring the PyTorch module's shapes (weights ~ N(0, 0.1);
    stored transposed as [in, out])."""
    k1, k2, k3, k4 = jax.random.split(key, 4)
    w1 = 0.1 * jax.random.normal(k1, (N_OBSERVATION, HIDDEN_NUMBER), jnp.float32)
    b1 = 0.01 * jax.random.normal(k2, (1, HIDDEN_NUMBER), jnp.float32)
    w2 = 0.1 * jax.random.normal(k3, (HIDDEN_NUMBER, N_ACTIONS), jnp.float32)
    b2 = 0.01 * jax.random.normal(k4, (1, N_ACTIONS), jnp.float32)
    return w1, b1, w2, b2


# TODO(synk): the DUELING=True branch (fc2/fc3 value streams + advantage recentring)
# is not exercised by the module (DUELING = False) and is not implemented here.

if __name__ == "__main__":
    key = jax.random.PRNGKey(0)
    kx1, kx2, kp = jax.random.split(key, 3)

    w1, b1, w2, b2 = init_params(kp)
    packed = prepare_params(w1, b1, w2, b2)   # one-time packing (hoisted out of hot path)

    # Case 1: small-ish batch -> single tile (tb = 384), "arbitrary" semantics.
    b_small = 300
    x_small = jax.random.normal(kx1, (b_small, N_OBSERVATION), jnp.float32)
    out_small = jax.block_until_ready(net_forward(x_small, *packed))
    ref_small = net_forward_xla(x_small, w1, b1, w2, b2)
    assert out_small.shape == (b_small, N_ACTIONS)
    assert jnp.allclose(out_small, ref_small, atol=1e-4, rtol=1e-4)

    # Case 2: replay-style batch -> 2 tiles of 512, even split -> "parallel".
    b_big = 1024
    x_big = jax.random.normal(kx2, (b_big, N_OBSERVATION), jnp.float32)
    out_big = jax.block_until_ready(net_forward(x_big, *packed))
    ref_big = net_forward_xla(x_big, w1, b1, w2, b2)
    assert out_big.shape == (b_big, N_ACTIONS)
    assert jnp.allclose(out_big, ref_big, atol=1e-4, rtol=1e-4)

    print("KERNEL_OK")
</pallas_src>

<mosaic_0001>
module attributes {stable_mosaic.version = 11 : i64} {
  func.func @_net_kernel(%arg0: i32, %arg1: memref<9x384xf32, #tpu.memory_space<vmem>>, %arg2: memref<128x9xf32, #tpu.memory_space<vmem>>, %arg3: memref<128x1xf32, #tpu.memory_space<vmem>>, %arg4: memref<8x128xf32, #tpu.memory_space<vmem>>, %arg5: memref<8x1xf32, #tpu.memory_space<vmem>>, %arg6: memref<8x384xf32, #tpu.memory_space<vmem>>) attributes {dimension_semantics = [#tpu.dimension_semantics<arbitrary>], iteration_bounds = array<i64: 1>, scalar_prefetch = 0 : i64, scratch_operands = 0 : i64, tpu.core_type = #tpu.core_type<tc>, window_params = [{transform_indices = @transform_0, window_bounds = array<i64: 9, 384>}, {pipeline_mode = #tpu.pipeline_mode<synchronous>, transform_indices = @transform_1, window_bounds = array<i64: 128, 9>}, {pipeline_mode = #tpu.pipeline_mode<synchronous>, transform_indices = @transform_2, window_bounds = array<i64: 128, 1>}, {pipeline_mode = #tpu.pipeline_mode<synchronous>, transform_indices = @transform_3, window_bounds = array<i64: 8, 128>}, {pipeline_mode = #tpu.pipeline_mode<synchronous>, transform_indices = @transform_4, window_bounds = array<i64: 8, 1>}, {transform_indices = @transform_5, window_bounds = array<i64: 8, 384>}]} {
    %c0 = arith.constant 0 : index
    %c0_0 = arith.constant 0 : index
    %0 = vector.load %arg1[%c0, %c0_0] : memref<9x384xf32, #tpu.memory_space<vmem>>, vector<9x384xf32>
    %c0_1 = arith.constant 0 : index
    %c0_2 = arith.constant 0 : index
    %1 = vector.load %arg2[%c0_1, %c0_2] : memref<128x9xf32, #tpu.memory_space<vmem>>, vector<128x9xf32>
    %c0_3 = arith.constant 0 : index
    %c0_4 = arith.constant 0 : index
    %2 = vector.load %arg3[%c0_3, %c0_4] : memref<128x1xf32, #tpu.memory_space<vmem>>, vector<128x1xf32>
    %3 = vector.shape_cast %2 : vector<128x1xf32> to vector<128x1xf32>
    %4 = vector.broadcast %3 : vector<128x1xf32> to vector<128x384xf32>
    %5 = vector.extract_strided_slice %1 {offsets = [0, 0], sizes = [128, 1], strides = [1, 1]} : vector<128x9xf32> to vector<128x1xf32>
    %6 = vector.extract_strided_slice %0 {offsets = [0, 0], sizes = [1, 384], strides = [1, 1]} : vector<9x384xf32> to vector<1x384xf32>
    %7 = vector.broadcast %5 : vector<128x1xf32> to vector<128x384xf32>
    %8 = vector.broadcast %6 : vector<1x384xf32> to vector<128x384xf32>
    %9 = arith.mulf %7, %8 : vector<128x384xf32>
    %10 = arith.addf %4, %9 : vector<128x384xf32>
    %11 = vector.extract_strided_slice %1 {offsets = [0, 1], sizes = [128, 1], strides = [1, 1]} : vector<128x9xf32> to vector<128x1xf32>
    %12 = vector.extract_strided_slice %0 {offsets = [1, 0], sizes = [1, 384], strides = [1, 1]} : vector<9x384xf32> to vector<1x384xf32>
    %13 = vector.broadcast %11 : vector<128x1xf32> to vector<128x384xf32>
    %14 = vector.broadcast %12 : vector<1x384xf32> to vector<128x384xf32>
    %15 = arith.mulf %13, %14 : vector<128x384xf32>
    %16 = arith.addf %10, %15 : vector<128x384xf32>
    %17 = vector.extract_strided_slice %1 {offsets = [0, 2], sizes = [128, 1], strides = [1, 1]} : vector<128x9xf32> to vector<128x1xf32>
    %18 = vector.extract_strided_slice %0 {offsets = [2, 0], sizes = [1, 384], strides = [1, 1]} : vector<9x384xf32> to vector<1x384xf32>
    %19 = vector.broadcast %17 : vector<128x1xf32> to vector<128x384xf32>
    %20 = vector.broadcast %18 : vector<1x384xf32> to vector<128x384xf32>
    %21 = arith.mulf %19, %20 : vector<128x384xf32>
    %22 = arith.addf %16, %21 : vector<128x384xf32>
    %23 = vector.extract_strided_slice %1 {offsets = [0, 3], sizes = [128, 1], strides = [1, 1]} : vector<128x9xf32> to vector<128x1xf32>
    %24 = vector.extract_strided_slice %0 {offsets = [3, 0], sizes = [1, 384], strides = [1, 1]} : vector<9x384xf32> to vector<1x384xf32>
    %25 = vector.broadcast %23 : vector<128x1xf32> to vector<128x384xf32>
    %26 = vector.broadcast %24 : vector<1x384xf32> to vector<128x384xf32>
    %27 = arith.mulf %25, %26 : vector<128x384xf32>
    %28 = arith.addf %22, %27 : vector<128x384xf32>
    %29 = vector.extract_strided_slice %1 {offsets = [0, 4], sizes = [128, 1], strides = [1, 1]} : vector<128x9xf32> to vector<128x1xf32>
    %30 = vector.extract_strided_slice %0 {offsets = [4, 0], sizes = [1, 384], strides = [1, 1]} : vector<9x384xf32> to vector<1x384xf32>
    %31 = vector.broadcast %29 : vector<128x1xf32> to vector<128x384xf32>
    %32 = vector.broadcast %30 : vector<1x384xf32> to vector<128x384xf32>
    %33 = arith.mulf %31, %32 : vector<128x384xf32>
    %34 = arith.addf %28, %33 : vector<128x384xf32>
    %35 = vector.extract_strided_slice %1 {offsets = [0, 5], sizes = [128, 1], strides = [1, 1]} : vector<128x9xf32> to vector<128x1xf32>
    %36 = vector.extract_strided_slice %0 {offsets = [5, 0], sizes = [1, 384], strides = [1, 1]} : vector<9x384xf32> to vector<1x384xf32>
    %37 = vector.broadcast %35 : vector<128x1xf32> to vector<128x384xf32>
    %38 = vector.broadcast %36 : vector<1x384xf32> to vector<128x384xf32>
    %39 = arith.mulf %37, %38 : vector<128x384xf32>
    %40 = arith.addf %34, %39 : vector<128x384xf32>
    %41 = vector.extract_strided_slice %1 {offsets = [0, 6], sizes = [128, 1], strides = [1, 1]} : vector<128x9xf32> to vector<128x1xf32>
    %42 = vector.extract_strided_slice %0 {offsets = [6, 0], sizes = [1, 384], strides = [1, 1]} : vector<9x384xf32> to vector<1x384xf32>
    %43 = vector.broadcast %41 : vector<128x1xf32> to vector<128x384xf32>
    %44 = vector.broadcast %42 : vector<1x384xf32> to vector<128x384xf32>
    %45 = arith.mulf %43, %44 : vector<128x384xf32>
    %46 = arith.addf %40, %45 : vector<128x384xf32>
    %47 = vector.extract_strided_slice %1 {offsets = [0, 7], sizes = [128, 1], strides = [1, 1]} : vector<128x9xf32> to vector<128x1xf32>
    %48 = vector.extract_strided_slice %0 {offsets = [7, 0], sizes = [1, 384], strides = [1, 1]} : vector<9x384xf32> to vector<1x384xf32>
    %49 = vector.broadcast %47 : vector<128x1xf32> to vector<128x384xf32>
    %50 = vector.broadcast %48 : vector<1x384xf32> to vector<128x384xf32>
    %51 = arith.mulf %49, %50 : vector<128x384xf32>
    %52 = arith.addf %46, %51 : vector<128x384xf32>
    %53 = vector.extract_strided_slice %1 {offsets = [0, 8], sizes = [128, 1], strides = [1, 1]} : vector<128x9xf32> to vector<128x1xf32>
    %54 = vector.extract_strided_slice %0 {offsets = [8, 0], sizes = [1, 384], strides = [1, 1]} : vector<9x384xf32> to vector<1x384xf32>
    %55 = vector.broadcast %53 : vector<128x1xf32> to vector<128x384xf32>
    %56 = vector.broadcast %54 : vector<1x384xf32> to vector<128x384xf32>
    %57 = arith.mulf %55, %56 : vector<128x384xf32>
    %58 = arith.addf %52, %57 : vector<128x384xf32>
    %cst = arith.constant 0.000000e+00 : f32
    %59 = vector.broadcast %cst : f32 to vector<128x384xf32>
    %60 = arith.maximumf %58, %59 : vector<128x384xf32>
    %c0_5 = arith.constant 0 : index
    %c0_6 = arith.constant 0 : index
    %61 = vector.load %arg4[%c0_5, %c0_6] : memref<8x128xf32, #tpu.memory_space<vmem>>, vector<8x128xf32>
    %cst_7 = arith.constant dense<0.000000e+00> : vector<8x384xf32>
    %62 = tpu.matmul %61, %60, %cst_7 {dimension_numbers = #tpu.dot_dimension_numbers<[1], [0], [0], [1], [0, 0, 1, 1], [], []>} : vector<8x128xf32>, vector<128x384xf32>, vector<8x384xf32> -> vector<8x384xf32>
    %c0_8 = arith.constant 0 : index
    %c0_9 = arith.constant 0 : index
    %63 = vector.load %arg5[%c0_8, %c0_9] : memref<8x1xf32, #tpu.memory_space<vmem>>, vector<8x1xf32>
    %64 = vector.broadcast %63 : vector<8x1xf32> to vector<8x384xf32>
    %65 = arith.addf %62, %64 : vector<8x384xf32>
    %c0_10 = arith.constant 0 : index
    %c0_11 = arith.constant 0 : index
    %66 = vector.load %arg6[%c0_10, %c0_11] : memref<8x384xf32, #tpu.memory_space<vmem>>, vector<8x384xf32>
    tpu.vector_store %arg6[%c0_10, %c0_11], %65 {strides = array<i32>} : memref<8x384xf32, #tpu.memory_space<vmem>>, vector<8x384xf32>,
    return
  }
  func.func @transform_0(%arg0: i32) -> (i32, i32) {
    %c0_i32 = arith.constant 0 : i32
    %c0_i32_0 = arith.constant 0 : i32
    return %c0_i32, %arg0 : i32, i32
  }
  func.func @transform_1(%arg0: i32) -> (i32, i32) {
    %c0_i32 = arith.constant 0 : i32
    %c0_i32_0 = arith.constant 0 : i32
    %c0_i32_1 = arith.constant 0 : i32
    return %c0_i32, %c0_i32_0 : i32, i32
  }
  func.func @transform_2(%arg0: i32) -> (i32, i32) {
    %c0_i32 = arith.constant 0 : i32
    %c0_i32_0 = arith.constant 0 : i32
    %c0_i32_1 = arith.constant 0 : i32
    return %c0_i32, %c0_i32_0 : i32, i32
  }
  func.func @transform_3(%arg0: i32) -> (i32, i32) {
    %c0_i32 = arith.constant 0 : i32
    %c0_i32_0 = arith.constant 0 : i32
    %c0_i32_1 = arith.constant 0 : i32
    return %c0_i32, %c0_i32_0 : i32, i32
  }
  func.func @transform_4(%arg0: i32) -> (i32, i32) {
    %c0_i32 = arith.constant 0 : i32
    %c0_i32_0 = arith.constant 0 : i32
    %c0_i32_1 = arith.constant 0 : i32
    return %c0_i32, %c0_i32_0 : i32, i32
  }
  func.func @transform_5(%arg0: i32) -> (i32, i32) {
    %c0_i32 = arith.constant 0 : i32
    %c0_i32_0 = arith.constant 0 : i32
    return %c0_i32, %arg0 : i32, i32
  }
}

</mosaic_0001>

<llo_original>
// kernel: net_forward.1
$region0: #{net_forward.1}
  #allocation0 [shape = 'u32[]', space=smem, size = 0x4, offset = 0x4, fixed_abs, tag = 'smem constant byte address 0x4 - core index']
  #allocation1 [shape = 'u32[72,128]{1,0:T(1,128)}', space=vmem, size = 0x9000, scoped, tag = 'internal scratch']
  %s0 = inlined_call_operand.vmem [shape: f32[9,384], index: 0, kind: input, shape index: {}]
  %s1 = inlined_call_operand.vmem [shape: f32[128,9], index: 1, kind: input, shape index: {}]
  %s2 = inlined_call_operand.vmem [shape: f32[128,1], index: 2, kind: input, shape index: {}]
  %s3 = inlined_call_operand.vmem [shape: f32[8,128], index: 3, kind: input, shape index: {}]
  %s4 = inlined_call_operand.vmem [shape: f32[8,1], index: 4, kind: input, shape index: {}]
  %s5 = inlined_call_operand.vmem [shape: f32[8,384], index: 5, kind: output, shape index: {}]
  %s6 = sld [smem:[#allocation0]]
  $region30: #{net_forward.1} parent=0
    _
  %s8 = ssub.s32 1, %s6
  %s9 = scalar_select 0, %s8, %s6
  // Predicated region
  $region2: #{net_forward.1} parent=0 // pred_check
    _
  $region3: #{net_forward.1} parent=0 // pred_check_branch
    %11 = sbr.rel (0) target = $region5
  $region4: #{net_forward.1} parent=0 // pred_region
    _
  $region5: #{net_forward.1} parent=0 // pred_fallthru
    _
  // Predicated region
  $region6: #{net_forward.1} parent=0 // pred_check
    _
  $region7: #{net_forward.1} parent=0 // pred_check_branch
    %13 = sbr.rel (0) target = $region9
  $region8: #{net_forward.1} parent=0 // pred_region
    _
  $region9: #{net_forward.1} parent=0 // pred_fallthru
    _
  // Predicated region
  $region10: #{net_forward.1} parent=0 // pred_check
    _
  $region11: #{net_forward.1} parent=0 // pred_check_branch
    %15 = sbr.rel (0) target = $region13
  $region12: #{net_forward.1} parent=0 // pred_region
    _
  $region13: #{net_forward.1} parent=0 // pred_fallthru
    _
  // Predicated region
  $region14: #{net_forward.1} parent=0 // pred_check
    _
  $region15: #{net_forward.1} parent=0 // pred_check_branch
    %17 = sbr.rel (0) target = $region17
  $region16: #{net_forward.1} parent=0 // pred_region
    _
  $region17: #{net_forward.1} parent=0 // pred_fallthru
    _
  // Predicated region
  $region18: #{net_forward.1} parent=0 // pred_check
    _
  $region19: #{net_forward.1} parent=0 // pred_check_branch
    %19 = sbr.rel (0) target = $region21
  $region20: #{net_forward.1} parent=0 // pred_region
    _
  $region21: #{net_forward.1} parent=0 // pred_fallthru
    _
  %v20 = vld [vmem:[%s0] sm:$0xff]
  %v21 = vld [vmem:[%s0 + $0x8] sm:$0xff]
  %v22 = vld [vmem:[%s0 + $0x10] sm:$0xff]
  %v23 = vld [vmem:[%s0 + $0x18] sm:$0x1]
  %v24 = vld [vmem:[%s0 + $0x20] sm:$0x1]
  %v25 = vld [vmem:[%s0 + $0x28] sm:$0x1]
  %v26 = vld [vmem:[%s1] sm:$0xff]
  %v27 = vld [vmem:[%s1 + $0x8] sm:$0xff]
  %v28 = vld [vmem:[%s1 + $0x10] sm:$0xff]
  %v29 = vld [vmem:[%s1 + $0x18] sm:$0xff]
  %v30 = vld [vmem:[%s1 + $0x20] sm:$0xff]
  %v31 = vld [vmem:[%s1 + $0x28] sm:$0xff]
  %v32 = vld [vmem:[%s1 + $0x30] sm:$0xff]
  %v33 = vld [vmem:[%s1 + $0x38] sm:$0xff]
  %v34 = vld [vmem:[%s1 + $0x40] sm:$0xff]
  %v35 = vld [vmem:[%s1 + $0x48] sm:$0xff]
  %v36 = vld [vmem:[%s1 + $0x50] sm:$0xff]
  %v37 = vld [vmem:[%s1 + $0x58] sm:$0xff]
  %v38 = vld [vmem:[%s1 + $0x60] sm:$0xff]
  %v39 = vld [vmem:[%s1 + $0x68] sm:$0xff]
  %v40 = vld [vmem:[%s1 + $0x70] sm:$0xff]
  %v41 = vld [vmem:[%s1 + $0x78] sm:$0xff]
  %v42 = vld [vmem:[%s2] sm:$0xff]
  %v43 = vld [vmem:[%s2 + $0x8] sm:$0xff]
  %v44 = vld [vmem:[%s2 + $0x10] sm:$0xff]
  %v45 = vld [vmem:[%s2 + $0x18] sm:$0xff]
  %v46 = vld [vmem:[%s2 + $0x20] sm:$0xff]
  %v47 = vld [vmem:[%s2 + $0x28] sm:$0xff]
  %v48 = vld [vmem:[%s2 + $0x30] sm:$0xff]
  %v49 = vld [vmem:[%s2 + $0x38] sm:$0xff]
  %v50 = vld [vmem:[%s2 + $0x40] sm:$0xff]
  %v51 = vld [vmem:[%s2 + $0x48] sm:$0xff]
  %v52 = vld [vmem:[%s2 + $0x50] sm:$0xff]
  %v53 = vld [vmem:[%s2 + $0x58] sm:$0xff]
  %v54 = vld [vmem:[%s2 + $0x60] sm:$0xff]
  %v55 = vld [vmem:[%s2 + $0x68] sm:$0xff]
  %v56 = vld [vmem:[%s2 + $0x70] sm:$0xff]
  %v57 = vld [vmem:[%s2 + $0x78] sm:$0xff]
  %59 = vset.pattern.permute.xlu0 0
  %60 = vperm.xlu0 %59, %v42
  %v61 = vpop.permute.xlu0 %60
  %64 = vset.pattern.permute.xlu0 0
  %65 = vperm.xlu0 %64, %v43
  %v66 = vpop.permute.xlu0 %65
  %69 = vset.pattern.permute.xlu0 0
  %70 = vperm.xlu0 %69, %v44
  %v71 = vpop.permute.xlu0 %70
  %74 = vset.pattern.permute.xlu0 0
  %75 = vperm.xlu0 %74, %v45
  %v76 = vpop.permute.xlu0 %75
  %79 = vset.pattern.permute.xlu0 0
  %80 = vperm.xlu0 %79, %v46
  %v81 = vpop.permute.xlu0 %80
  %84 = vset.pattern.permute.xlu0 0
  %85 = vperm.xlu0 %84, %v47
  %v86 = vpop.permute.xlu0 %85
  %89 = vset.pattern.permute.xlu0 0
  %90 = vperm.xlu0 %89, %v48
  %v91 = vpop.permute.xlu0 %90
  %94 = vset.pattern.permute.xlu0 0
  %95 = vperm.xlu0 %94, %v49
  %v96 = vpop.permute.xlu0 %95
  %99 = vset.pattern.permute.xlu0 0
  %100 = vperm.xlu0 %99, %v50
  %v101 = vpop.permute.xlu0 %100
  %104 = vset.pattern.permute.xlu0 0
  %105 = vperm.xlu0 %104, %v51
  %v106 = vpop.permute.xlu0 %105
  %109 = vset.pattern.permute.xlu0 0
  %110 = vperm.xlu0 %109, %v52
  %v111 = vpop.permute.xlu0 %110
  %114 = vset.pattern.permute.xlu0 0
  %115 = vperm.xlu0 %114, %v53
  %v116 = vpop.permute.xlu0 %115
  %119 = vset.pattern.permute.xlu0 0
  %120 = vperm.xlu0 %119, %v54
  %v121 = vpop.permute.xlu0 %120
  %124 = vset.pattern.permute.xlu0 0
  %125 = vperm.xlu0 %124, %v55
  %v126 = vpop.permute.xlu0 %125
  %129 = vset.pattern.permute.xlu0 0
  %130 = vperm.xlu0 %129, %v56
  %v131 = vpop.permute.xlu0 %130
  %134 = vset.pattern.permute.xlu0 0
  %135 = vperm.xlu0 %134, %v57
  %v136 = vpop.permute.xlu0 %135
  %139 = vset.pattern.permute.xlu0 0
  %140 = vperm.xlu0 %139, %v26
  %v141 = vpop.permute.xlu0 %140
  %144 = vset.pattern.permute.xlu0 0
  %145 = vperm.xlu0 %144, %v27
  %v146 = vpop.permute.xlu0 %145
  %149 = vset.pattern.permute.xlu0 0
  %150 = vperm.xlu0 %149, %v28
  %v151 = vpop.permute.xlu0 %150
  %154 = vset.pattern.permute.xlu0 0
  %155 = vperm.xlu0 %154, %v29
  %v156 = vpop.permute.xlu0 %155
  %159 = vset.pattern.permute.xlu0 0
  %160 = vperm.xlu0 %159, %v30
  %v161 = vpop.permute.xlu0 %160
  %164 = vset.pattern.permute.xlu0 0
  %165 = vperm.xlu0 %164, %v31
  %v166 = vpop.permute.xlu0 %165
  %169 = vset.pattern.permute.xlu0 0
  %170 = vperm.xlu0 %169, %v32
  %v171 = vpop.permute.xlu0 %170
  %174 = vset.pattern.permute.xlu0 0
  %175 = vperm.xlu0 %174, %v33
  %v176 = vpop.permute.xlu0 %175
  %179 = vset.pattern.permute.xlu0 0
  %180 = vperm.xlu0 %179, %v34
  %v181 = vpop.permute.xlu0 %180
  %184 = vset.pattern.permute.xlu0 0
  %185 = vperm.xlu0 %184, %v35
  %v186 = vpop.permute.xlu0 %185
  %189 = vset.pattern.permute.xlu0 0
  %190 = vperm.xlu0 %189, %v36
  %v191 = vpop.permute.xlu0 %190
  %194 = vset.pattern.permute.xlu0 0
  %195 = vperm.xlu0 %194, %v37
  %v196 = vpop.permute.xlu0 %195
  %199 = vset.pattern.permute.xlu0 0
  %200 = vperm.xlu0 %199, %v38
  %v201 = vpop.permute.xlu0 %200
  %204 = vset.pattern.permute.xlu0 0
  %205 = vperm.xlu0 %204, %v39
  %v206 = vpop.permute.xlu0 %205
  %209 = vset.pattern.permute.xlu0 0
  %210 = vperm.xlu0 %209, %v40
  %v211 = vpop.permute.xlu0 %210
  %214 = vset.pattern.permute.xlu0 0
  %215 = vperm.xlu0 %214, %v41
  %v216 = vpop.permute.xlu0 %215
  %v218 = vperm.slane %v20, 0
  %v219 = vperm.slane %v21, 0
  %v220 = vperm.slane %v22, 0
  %v221 = vmul.f32 %v141, %v218
  %v222 = vmul.f32 %v141, %v219
  %v223 = vmul.f32 %v141, %v220
  %v224 = vmul.f32 %v146, %v218
  %v225 = vmul.f32 %v146, %v219
  %v226 = vmul.f32 %v146, %v220
  %v227 = vmul.f32 %v151, %v218
  %v228 = vmul.f32 %v151, %v219
  %v229 = vmul.f32 %v151, %v220
  %v230 = vmul.f32 %v156, %v218
  %v231 = vmul.f32 %v156, %v219
  %v232 = vmul.f32 %v156, %v220
  %v233 = vmul.f32 %v161, %v218
  %v234 = vmul.f32 %v161, %v219
  %v235 = vmul.f32 %v161, %v220
  %v236 = vmul.f32 %v166, %v218
  %v237 = vmul.f32 %v166, %v219
  %v238 = vmul.f32 %v166, %v220
  %v239 = vmul.f32 %v171, %v218
  %v240 = vmul.f32 %v171, %v219
  %v241 = vmul.f32 %v171, %v220
  %v242 = vmul.f32 %v176, %v218
  %v243 = vmul.f32 %v176, %v219
  %v244 = vmul.f32 %v176, %v220
  %v245 = vmul.f32 %v181, %v218
  %v246 = vmul.f32 %v181, %v219
  %v247 = vmul.f32 %v181, %v220
  %v248 = vmul.f32 %v186, %v218
  %v249 = vmul.f32 %v186, %v219
  %v250 = vmul.f32 %v186, %v220
  %v251 = vmul.f32 %v191, %v218
  %v252 = vmul.f32 %v191, %v219
  %v253 = vmul.f32 %v191, %v220
  %v254 = vmul.f32 %v196, %v218
  %v255 = vmul.f32 %v196, %v219
  %v256 = vmul.f32 %v196, %v220
  %v257 = vmul.f32 %v201, %v218
  %v258 = vmul.f32 %v201, %v219
  %v259 = vmul.f32 %v201, %v220
  %v260 = vmul.f32 %v206, %v218
  %v261 = vmul.f32 %v206, %v219
  %v262 = vmul.f32 %v206, %v220
  %v263 = vmul.f32 %v211, %v218
  %v264 = vmul.f32 %v211, %v219
  %v265 = vmul.f32 %v211, %v220
  %v266 = vmul.f32 %v216, %v218
  %v267 = vmul.f32 %v216, %v219
  %v268 = vmul.f32 %v216, %v220
  %v269 = vadd.f32 %v61, %v221
  %v270 = vadd.f32 %v61, %v222
  %v271 = vadd.f32 %v61, %v223
  %v272 = vadd.f32 %v66, %v224
  %v273 = vadd.f32 %v66, %v225
  %v274 = vadd.f32 %v66, %v226
  %v275 = vadd.f32 %v71, %v227
  %v276 = vadd.f32 %v71, %v228
  %v277 = vadd.f32 %v71, %v229
  %v278 = vadd.f32 %v76, %v230
  %v279 = vadd.f32 %v76, %v231
  %v280 = vadd.f32 %v76, %v232
  %v281 = vadd.f32 %v81, %v233
  %v282 = vadd.f32 %v81, %v234
  %v283 = vadd.f32 %v81, %v235
  %v284 = vadd.f32 %v86, %v236
  %v285 = vadd.f32 %v86, %v237
  %v286 = vadd.f32 %v86, %v238
  %v287 = vadd.f32 %v91, %v239
  %v288 = vadd.f32 %v91, %v240
  %v289 = vadd.f32 %v91, %v241
  %v290 = vadd.f32 %v96, %v242
  %v291 = vadd.f32 %v96, %v243
  %v292 = vadd.f32 %v96, %v244
  %v293 = vadd.f32 %v101, %v245
  %v294 = vadd.f32 %v101, %v246
  %v295 = vadd.f32 %v101, %v247
  %v296 = vadd.f32 %v106, %v248
  %v297 = vadd.f32 %v106, %v249
  %v298 = vadd.f32 %v106, %v250
  %v299 = vadd.f32 %v111, %v251
  %v300 = vadd.f32 %v111, %v252
  %v301 = vadd.f32 %v111, %v253
  %v302 = vadd.f32 %v116, %v254
  %v303 = vadd.f32 %v116, %v255
  %v304 = vadd.f32 %v116, %v256
  %v305 = vadd.f32 %v121, %v257
  %v306 = vadd.f32 %v121, %v258
  %v307 = vadd.f32 %v121, %v259
  %v308 = vadd.f32 %v126, %v260
  %v309 = vadd.f32 %v126, %v261
  %v310 = vadd.f32 %v126, %v262
  %v311 = vadd.f32 %v131, %v263
  %v312 = vadd.f32 %v131, %v264
  %v313 = vadd.f32 %v131, %v265
  %v314 = vadd.f32 %v136, %v266
  %v315 = vadd.f32 %v136, %v267
  %v316 = vadd.f32 %v136, %v268
  %317 = vset.pattern.permute.xlu0 1
  %318 = vperm.xlu0 %317, %v26
  %v319 = vpop.permute.xlu0 %318
  %321 = vset.pattern.permute.xlu0 1
  %322 = vperm.xlu0 %321, %v27
  %v323 = vpop.permute.xlu0 %322
  %325 = vset.pattern.permute.xlu0 1
  %326 = vperm.xlu0 %325, %v28
  %v327 = vpop.permute.xlu0 %326
  %329 = vset.pattern.permute.xlu0 1
  %330 = vperm.xlu0 %329, %v29
  %v331 = vpop.permute.xlu0 %330
  %333 = vset.pattern.permute.xlu0 1
  %334 = vperm.xlu0 %333, %v30
  %v335 = vpop.permute.xlu0 %334
  %337 = vset.pattern.permute.xlu0 1
  %338 = vperm.xlu0 %337, %v31
  %v339 = vpop.permute.xlu0 %338
  %341 = vset.pattern.permute.xlu0 1
  %342 = vperm.xlu0 %341, %v32
  %v343 = vpop.permute.xlu0 %342
  %345 = vset.pattern.permute.xlu0 1
  %346 = vperm.xlu0 %345, %v33
  %v347 = vpop.permute.xlu0 %346
  %349 = vset.pattern.permute.xlu0 1
  %350 = vperm.xlu0 %349, %v34
  %v351 = vpop.permute.xlu0 %350
  %353 = vset.pattern.permute.xlu0 1
  %354 = vperm.xlu0 %353, %v35
  %v355 = vpop.permute.xlu0 %354
  %357 = vset.pattern.permute.xlu0 1
  %358 = vperm.xlu0 %357, %v36
  %v359 = vpop.permute.xlu0 %358
  %361 = vset.pattern.permute.xlu0 1
  %362 = vperm.xlu0 %361, %v37
  %v363 = vpop.permute.xlu0 %362
  %365 = vset.pattern.permute.xlu0 1
  %366 = vperm.xlu0 %365, %v38
  %v367 = vpop.permute.xlu0 %366
  %369 = vset.pattern.permute.xlu0 1
  %370 = vperm.xlu0 %369, %v39
  %v371 = vpop.permute.xlu0 %370
  %373 = vset.pattern.permute.xlu0 1
  %374 = vperm.xlu0 %373, %v40
  %v375 = vpop.permute.xlu0 %374
  %377 = vset.pattern.permute.xlu0 1
  %378 = vperm.xlu0 %377, %v41
  %v379 = vpop.permute.xlu0 %378
  %v381 = vperm.slane %v20, 1
  %v382 = vperm.slane %v21, 1
  %v383 = vperm.slane %v22, 1
  %v384 = vmul.f32 %v319, %v381
  %v385 = vmul.f32 %v319, %v382
  %v386 = vmul.f32 %v319, %v383
  %v387 = vmul.f32 %v323, %v381
  %v388 = vmul.f32 %v323, %v382
  %v389 = vmul.f32 %v323, %v383
  %v390 = vmul.f32 %v327, %v381
  %v391 = vmul.f32 %v327, %v382
  %v392 = vmul.f32 %v327, %v383
  %v393 = vmul.f32 %v331, %v381
  %v394 = vmul.f32 %v331, %v382
  %v395 = vmul.f32 %v331, %v383
  %v396 = vmul.f32 %v335, %v381
  %v397 = vmul.f32 %v335, %v382
  %v398 = vmul.f32 %v335, %v383
  %v399 = vmul.f32 %v339, %v381
  %v400 = vmul.f32 %v339, %v382
  %v401 = vmul.f32 %v339, %v383
  %v402 = vmul.f32 %v343, %v381
  %v403 = vmul.f32 %v343, %v382
  %v404 = vmul.f32 %v343, %v383
  %v405 = vmul.f32 %v347, %v381
  %v406 = vmul.f32 %v347, %v382
  %v407 = vmul.f32 %v347, %v383
  %v408 = vmul.f32 %v351, %v381
  %v409 = vmul.f32 %v351, %v382
  %v410 = vmul.f32 %v351, %v383
  %v411 = vmul.f32 %v355, %v381
  %v412 = vmul.f32 %v355, %v382
  %v413 = vmul.f32 %v355, %v383
  %v414 = vmul.f32 %v359, %v381
  %v415 = vmul.f32 %v359, %v382
  %v416 = vmul.f32 %v359, %v383
  %v417 = vmul.f32 %v363, %v381
  %v418 = vmul.f32 %v363, %v382
  %v419 = vmul.f32 %v363, %v383
  %v420 = vmul.f32 %v367, %v381
  %v421 = vmul.f32 %v367, %v382
  %v422 = vmul.f32 %v367, %v383
  %v423 = vmul.f32 %v371, %v381
  %v424 = vmul.f32 %v371, %v382
  %v425 = vmul.f32 %v371, %v383
  %v426 = vmul.f32 %v375, %v381
  %v427 = vmul.f32 %v375, %v382
  %v428 = vmul.f32 %v375, %v383
  %v429 = vmul.f32 %v379, %v381
  %v430 = vmul.f32 %v379, %v382
  %v431 = vmul.f32 %v379, %v383
  %v432 = vadd.f32 %v269, %v384
  %v433 = vadd.f32 %v270, %v385
  %v434 = vadd.f32 %v271, %v386
  %v435 = vadd.f32 %v272, %v387
  %v436 = vadd.f32 %v273, %v388
  %v437 = vadd.f32 %v274, %v389
  %v438 = vadd.f32 %v275, %v390
  %v439 = vadd.f32 %v276, %v391
  %v440 = vadd.f32 %v277, %v392
  %v441 = vadd.f32 %v278, %v393
  %v442 = vadd.f32 %v279, %v394
  %v443 = vadd.f32 %v280, %v395
  %v444 = vadd.f32 %v281, %v396
  %v445 = vadd.f32 %v282, %v397
  %v446 = vadd.f32 %v283, %v398
  %v447 = vadd.f32 %v284, %v399
  %v448 = vadd.f32 %v285, %v400
  %v449 = vadd.f32 %v286, %v401
  %v450 = vadd.f32 %v287, %v402
  %v451 = vadd.f32 %v288, %v403
  %v452 = vadd.f32 %v289, %v404
  %v453 = vadd.f32 %v290, %v405
  %v454 = vadd.f32 %v291, %v406
  %v455 = vadd.f32 %v292, %v407
  %v456 = vadd.f32 %v293, %v408
  %v457 = vadd.f32 %v294, %v409
  %v458 = vadd.f32 %v295, %v410
  %v459 = vadd.f32 %v296, %v411
  %v460 = vadd.f32 %v297, %v412
  %v461 = vadd.f32 %v298, %v413
  %v462 = vadd.f32 %v299, %v414
  %v463 = vadd.f32 %v300, %v415
  %v464 = vadd.f32 %v301, %v416
  %v465 = vadd.f32 %v302, %v417
  %v466 = vadd.f32 %v303, %v418
  %v467 = vadd.f32 %v304, %v419
  %v468 = vadd.f32 %v305, %v420
  %v469 = vadd.f32 %v306, %v421
  %v470 = vadd.f32 %v307, %v422
  %v471 = vadd.f32 %v308, %v423
  %v472 = vadd.f32 %v309, %v424
  %v473 = vadd.f32 %v310, %v425
  %v474 = vadd.f32 %v311, %v426
  %v475 = vadd.f32 %v312, %v427
  %v476 = vadd.f32 %v313, %v428
  %v477 = vadd.f32 %v314, %v429
  %v478 = vadd.f32 %v315, %v430
  %v479 = vadd.f32 %v316, %v431
  %480 = vset.pattern.permute.xlu0 2
  %481 = vperm.xlu0 %480, %v26
  %v482 = vpop.permute.xlu0 %481
  %484 = vset.pattern.permute.xlu0 2
  %485 = vperm.xlu0 %484, %v27
  %v486 = vpop.permute.xlu0 %485
  %488 = vset.pattern.permute.xlu0 2
  %489 = vperm.xlu0 %488, %v28
  %v490 = vpop.permute.xlu0 %489
  %492 = vset.pattern.permute.xlu0 2
  %493 = vperm.xlu0 %492, %v29
  %v494 = vpop.permute.xlu0 %493
  %496 = vset.pattern.permute.xlu0 2
  %497 = vperm.xlu0 %496, %v30
  %v498 = vpop.permute.xlu0 %497
  %500 = vset.pattern.permute.xlu0 2
  %501 = vperm.xlu0 %500, %v31
  %v502 = vpop.permute.xlu0 %501
  %504 = vset.pattern.permute.xlu0 2
  %505 = vperm.xlu0 %504, %v32
  %v506 = vpop.permute.xlu0 %505
  %508 = vset.pattern.permute.xlu0 2
  %509 = vperm.xlu0 %508, %v33
  %v510 = vpop.permute.xlu0 %509
  %512 = vset.pattern.permute.xlu0 2
  %513 = vperm.xlu0 %512, %v34
  %v514 = vpop.permute.xlu0 %513
  %516 = vset.pattern.permute.xlu0 2
  %517 = vperm.xlu0 %516, %v35
  %v518 = vpop.permute.xlu0 %517
  %520 = vset.pattern.permute.xlu0 2
  %521 = vperm.xlu0 %520, %v36
  %v522 = vpop.permute.xlu0 %521
  %524 = vset.pattern.permute.xlu0 2
  %525 = vperm.xlu0 %524, %v37
  %v526 = vpop.permute.xlu0 %525
  %528 = vset.pattern.permute.xlu0 2
  %529 = vperm.xlu0 %528, %v38
  %v530 = vpop.permute.xlu0 %529
  %532 = vset.pattern.permute.xlu0 2
  %533 = vperm.xlu0 %532, %v39
  %v534 = vpop.permute.xlu0 %533
  %536 = vset.pattern.permute.xlu0 2
  %537 = vperm.xlu0 %536, %v40
  %v538 = vpop.permute.xlu0 %537
  %540 = vset.pattern.permute.xlu0 2
  %541 = vperm.xlu0 %540, %v41
  %v542 = vpop.permute.xlu0 %541
  %v544 = vperm.slane %v20, 2
  %v545 = vperm.slane %v21, 2
  %v546 = vperm.slane %v22, 2
  %v547 = vmul.f32 %v482, %v544
  %v548 = vmul.f32 %v482, %v545
  %v549 = vmul.f32 %v482, %v546
  %v550 = vmul.f32 %v486, %v544
  %v551 = vmul.f32 %v486, %v545
  %v552 = vmul.f32 %v486, %v546
  %v553 = vmul.f32 %v490, %v544
  %v554 = vmul.f32 %v490, %v545
  %v555 = vmul.f32 %v490, %v546
  %v556 = vmul.f32 %v494, %v544
  %v557 = vmul.f32 %v494, %v545
  %v558 = vmul.f32 %v494, %v546
  %v559 = vmul.f32 %v498, %v544
  %v560 = vmul.f32 %v498, %v545
  %v561 = vmul.f32 %v498, %v546
  %v562 = vmul.f32 %v502, %v544
  %v563 = vmul.f32 %v502, %v545
  %v564 = vmul.f32 %v502, %v546
  %v565 = vmul.f32 %v506, %v544
  %v566 = vmul.f32 %v506, %v545
  %v567 = vmul.f32 %v506, %v546
  %v568 = vmul.f32 %v510, %v544
  %v569 = vmul.f32 %v510, %v545
  %v570 = vmul.f32 %v510, %v546
  %v571 = vmul.f32 %v514, %v544
  %v572 = vmul.f32 %v514, %v545
  %v573 = vmul.f32 %v514, %v546
  %v574 = vmul.f32 %v518, %v544
  %v575 = vmul.f32 %v518, %v545
  %v576 = vmul.f32 %v518, %v546
  %v577 = vmul.f32 %v522, %v544
  %v578 = vmul.f32 %v522, %v545
  %v579 = vmul.f32 %v522, %v546
  %v580 = vmul.f32 %v526, %v544
  %v581 = vmul.f32 %v526, %v545
  %v582 = vmul.f32 %v526, %v546
  %v583 = vmul.f32 %v530, %v544
  %v584 = vmul.f32 %v530, %v545
  %v585 = vmul.f32 %v530, %v546
  %v586 = vmul.f32 %v534, %v544
  %v587 = vmul.f32 %v534, %v545
  %v588 = vmul.f32 %v534, %v546
  %v589 = vmul.f32 %v538, %v544
  %v590 = vmul.f32 %v538, %v545
  %v591 = vmul.f32 %v538, %v546
  %v592 = vmul.f32 %v542, %v544
  %v593 = vmul.f32 %v542, %v545
  %v594 = vmul.f32 %v542, %v546
  %v595 = vadd.f32 %v432, %v547
  %v596 = vadd.f32 %v433, %v548
  %v597 = vadd.f32 %v434, %v549
  %v598 = vadd.f32 %v435, %v550
  %v599 = vadd.f32 %v436, %v551
  %v600 = vadd.f32 %v437, %v552
  %v601 = vadd.f32 %v438, %v553
  %v602 = vadd.f32 %v439, %v554
  %v603 = vadd.f32 %v440, %v555
  %v604 = vadd.f32 %v441, %v556
  %v605 = vadd.f32 %v442, %v557
  %v606 = vadd.f32 %v443, %v558
  %v607 = vadd.f32 %v444, %v559
  %v608 = vadd.f32 %v445, %v560
  %v609 = vadd.f32 %v446, %v561
  %v610 = vadd.f32 %v447, %v562
  %v611 = vadd.f32 %v448, %v563
  %v612 = vadd.f32 %v449, %v564
  %v613 = vadd.f32 %v450, %v565
  %v614 = vadd.f32 %v451, %v566
  %v615 = vadd.f32 %v452, %v567
  %v616 = vadd.f32 %v453, %v568
  %v617 = vadd.f32 %v454, %v569
  %v618 = vadd.f32 %v455, %v570
  %v619 = vadd.f32 %v456, %v571
  %v620 = vadd.f32 %v457, %v572
  %v621 = vadd.f32 %v458, %v573
  %v622 = vadd.f32 %v459, %v574
  %v623 = vadd.f32 %v460, %v575
  %v624 = vadd.f32 %v461, %v576
  %v625 = vadd.f32 %v462, %v577
  %v626 = vadd.f32 %v463, %v578
  %v627 = vadd.f32 %v464, %v579
  %v628 = vadd.f32 %v465, %v580
  %v629 = vadd.f32 %v466, %v581
  %v630 = vadd.f32 %v467, %v582
  %v631 = vadd.f32 %v468, %v583
  %v632 = vadd.f32 %v469, %v584
  %v633 = vadd.f32 %v470, %v585
  %v634 = vadd.f32 %v471, %v586
  %v635 = vadd.f32 %v472, %v587
  %v636 = vadd.f32 %v473, %v588
  %v637 = vadd.f32 %v474, %v589
  %v638 = vadd.f32 %v475, %v590
  %v639 = vadd.f32 %v476, %v591
  %v640 = vadd.f32 %v477, %v592
  %v641 = vadd.f32 %v478, %v593
  %v642 = vadd.f32 %v479, %v594
  %643 = vset.pattern.permute.xlu0 3
  %644 = vperm.xlu0 %643, %v26
  %v645 = vpop.permute.xlu0 %644
  %647 = vset.pattern.permute.xlu0 3
  %648 = vperm.xlu0 %647, %v27
  %v649 = vpop.permute.xlu0 %648
  %651 = vset.pattern.permute.xlu0 3
  %652 = vperm.xlu0 %651, %v28
  %v653 = vpop.permute.xlu0 %652
  %655 = vset.pattern.permute.xlu0 3
  %656 = vperm.xlu0 %655, %v29
  %v657 = vpop.permute.xlu0 %656
  %659 = vset.pattern.permute.xlu0 3
  %660 = vperm.xlu0 %659, %v30
  %v661 = vpop.permute.xlu0 %660
  %663 = vset.pattern.permute.xlu0 3
  %664 = vperm.xlu0 %663, %v31
  %v665 = vpop.permute.xlu0 %664
  %667 = vset.pattern.permute.xlu0 3
  %668 = vperm.xlu0 %667, %v32
  %v669 = vpop.permute.xlu0 %668
  %671 = vset.pattern.permute.xlu0 3
  %672 = vperm.xlu0 %671, %v33
  %v673 = vpop.permute.xlu0 %672
  %675 = vset.pattern.permute.xlu0 3
  %676 = vperm.xlu0 %675, %v34
  %v677 = vpop.permute.xlu0 %676
  %679 = vset.pattern.permute.xlu0 3
  %680 = vperm.xlu0 %679, %v35
  %v681 = vpop.permute.xlu0 %680
  %683 = vset.pattern.permute.xlu0 3
  %684 = vperm.xlu0 %683, %v36
  %v685 = vpop.permute.xlu0 %684
  %687 = vset.pattern.permute.xlu0 3
  %688 = vperm.xlu0 %687, %v37
  %v689 = vpop.permute.xlu0 %688
  %691 = vset.pattern.permute.xlu0 3
  %692 = vperm.xlu0 %691, %v38
  %v693 = vpop.permute.xlu0 %692
  %695 = vset.pattern.permute.xlu0 3
  %696 = vperm.xlu0 %695, %v39
  %v697 = vpop.permute.xlu0 %696
  %699 = vset.pattern.permute.xlu0 3
  %700 = vperm.xlu0 %699, %v40
  %v701 = vpop.permute.xlu0 %700
  %703 = vset.pattern.permute.xlu0 3
  %704 = vperm.xlu0 %703, %v41
  %v705 = vpop.permute.xlu0 %704
  %v707 = vperm.slane %v20, 3
  %v708 = vperm.slane %v21, 3
  %v709 = vperm.slane %v22, 3
  %v710 = vmul.f32 %v645, %v707
  %v711 = vmul.f32 %v645, %v708
  %v712 = vmul.f32 %v645, %v709
  %v713 = vmul.f32 %v649, %v707
  %v714 = vmul.f32 %v649, %v708
  %v715 = vmul.f32 %v649, %v709
  %v716 = vmul.f32 %v653, %v707
  %v717 = vmul.f32 %v653, %v708
  %v718 = vmul.f32 %v653, %v709
  %v719 = vmul.f32 %v657, %v707
  %v720 = vmul.f32 %v657, %v708
  %v721 = vmul.f32 %v657, %v709
  %v722 = vmul.f32 %v661, %v707
  %v723 = vmul.f32 %v661, %v708
  %v724 = vmul.f32 %v661, %v709
  %v725 = vmul.f32 %v665, %v707
  %v726 = vmul.f32 %v665, %v708
  %v727 = vmul.f32 %v665, %v709
  %v728 = vmul.f32 %v669, %v707
  %v729 = vmul.f32 %v669, %v708
  %v730 = vmul.f32 %v669, %v709
  %v731 = vmul.f32 %v673, %v707
  %v732 = vmul.f32 %v673, %v708
  %v733 = vmul.f32 %v673, %v709
  %v734 = vmul.f32 %v677, %v707
  %v735 = vmul.f32 %v677, %v708
  %v736 = vmul.f32 %v677, %v709
  %v737 = vmul.f32 %v681, %v707
  %v738 = vmul.f32 %v681, %v708
  %v739 = vmul.f32 %v681, %v709
  %v740 = vmul.f32 %v685, %v707
  %v741 = vmul.f32 %v685, %v708
  %v742 = vmul.f32 %v685, %v709
  %v743 = vmul.f32 %v689, %v707
  %v744 = vmul.f32 %v689, %v708
  %v745 = vmul.f32 %v689, %v709
  %v746 = vmul.f32 %v693, %v707
  %v747 = vmul.f32 %v693, %v708
  %v748 = vmul.f32 %v693, %v709
  %v749 = vmul.f32 %v697, %v707
  %v750 = vmul.f32 %v697, %v708
  %v751 = vmul.f32 %v697, %v709
  %v752 = vmul.f32 %v701, %v707
  %v753 = vmul.f32 %v701, %v708
  %v754 = vmul.f32 %v701, %v709
  %v755 = vmul.f32 %v705, %v707
  %v756 = vmul.f32 %v705, %v708
  %v757 = vmul.f32 %v705, %v709
  %v758 = vadd.f32 %v595, %v710
  %v759 = vadd.f32 %v596, %v711
  %v760 = vadd.f32 %v597, %v712
  %v761 = vadd.f32 %v598, %v713
  %v762 = vadd.f32 %v599, %v714
  %v763 = vadd.f32 %v600, %v715
  %v764 = vadd.f32 %v601, %v716
  %v765 = vadd.f32 %v602, %v717
  %v766 = vadd.f32 %v603, %v718
  %v767 = vadd.f32 %v604, %v719
  %v768 = vadd.f32 %v605, %v720
  %v769 = vadd.f32 %v606, %v721
  %v770 = vadd.f32 %v607, %v722
  %v771 = vadd.f32 %v608, %v723
  %v772 = vadd.f32 %v609, %v724
  %v773 = vadd.f32 %v610, %v725
  %v774 = vadd.f32 %v611, %v726
  %v775 = vadd.f32 %v612, %v727
  %v776 = vadd.f32 %v613, %v728
  %v777 = vadd.f32 %v614, %v729
  %v778 = vadd.f32 %v615, %v730
  %v779 = vadd.f32 %v616, %v731
  %v780 = vadd.f32 %v617, %v732
  %v781 = vadd.f32 %v618, %v733
  %v782 = vadd.f32 %v619, %v734
  %v783 = vadd.f32 %v620, %v735
  %v784 = vadd.f32 %v621, %v736
  %v785 = vadd.f32 %v622, %v737
  %v786 = vadd.f32 %v623, %v738
  %v787 = vadd.f32 %v624, %v739
  %v788 = vadd.f32 %v625, %v740
  %v789 = vadd.f32 %v626, %v741
  %v790 = vadd.f32 %v627, %v742
  %v791 = vadd.f32 %v628, %v743
  %v792 = vadd.f32 %v629, %v744
  %v793 = vadd.f32 %v630, %v745
  %v794 = vadd.f32 %v631, %v746
  %v795 = vadd.f32 %v632, %v747
  %v796 = vadd.f32 %v633, %v748
  %v797 = vadd.f32 %v634, %v749
  %v798 = vadd.f32 %v635, %v750
  %v799 = vadd.f32 %v636, %v751
  %v800 = vadd.f32 %v637, %v752
  %v801 = vadd.f32 %v638, %v753
  %v802 = vadd.f32 %v639, %v754
  %v803 = vadd.f32 %v640, %v755
  %v804 = vadd.f32 %v641, %v756
  %v805 = vadd.f32 %v642, %v757
  %806 = vset.pattern.permute.xlu0 4
  %807 = vperm.xlu0 %806, %v26
  %v808 = vpop.permute.xlu0 %807
  %810 = vset.pattern.permute.xlu0 4
  %811 = vperm.xlu0 %810, %v27
  %v812 = vpop.permute.xlu0 %811
  %814 = vset.pattern.permute.xlu0 4
  %815 = vperm.xlu0 %814, %v28
  %v816 = vpop.permute.xlu0 %815
  %818 = vset.pattern.permute.xlu0 4
  %819 = vperm.xlu0 %818, %v29
  %v820 = vpop.permute.xlu0 %819
  %822 = vset.pattern.permute.xlu0 4
  %823 = vperm.xlu0 %822, %v30
  %v824 = vpop.permute.xlu0 %823
  %826 = vset.pattern.permute.xlu0 4
  %827 = vperm.xlu0 %826, %v31
  %v828 = vpop.permute.xlu0 %827
  %830 = vset.pattern.permute.xlu0 4
  %831 = vperm.xlu0 %830, %v32
  %v832 = vpop.permute.xlu0 %831
  %834 = vset.pattern.permute.xlu0 4
  %835 = vperm.xlu0 %834, %v33
  %v836 = vpop.permute.xlu0 %835
  %838 = vset.pattern.permute.xlu0 4
  %839 = vperm.xlu0 %838, %v34
  %v840 = vpop.permute.xlu0 %839
  %842 = vset.pattern.permute.xlu0 4
  %843 = vperm.xlu0 %842, %v35
  %v844 = vpop.permute.xlu0 %843
  %846 = vset.pattern.permute.xlu0 4
  %847 = vperm.xlu0 %846, %v36
  %v848 = vpop.permute.xlu0 %847
  %850 = vset.pattern.permute.xlu0 4
  %851 = vperm.xlu0 %850, %v37
  %v852 = vpop.permute.xlu0 %851
  %854 = vset.pattern.permute.xlu0 4
  %855 = vperm.xlu0 %854, %v38
  %v856 = vpop.permute.xlu0 %855
  %858 = vset.pattern.permute.xlu0 4
  %859 = vperm.xlu0 %858, %v39
  %v860 = vpop.permute.xlu0 %859
  %862 = vset.pattern.permute.xlu0 4
  %863 = vperm.xlu0 %862, %v40
  %v864 = vpop.permute.xlu0 %863
  %866 = vset.pattern.permute.xlu0 4
  %867 = vperm.xlu0 %866, %v41
  %v868 = vpop.permute.xlu0 %867
  %v870 = vperm.slane %v20, 4
  %v871 = vperm.slane %v21, 4
  %v872 = vperm.slane %v22, 4
  %v873 = vmul.f32 %v808, %v870
  %v874 = vmul.f32 %v808, %v871
  %v875 = vmul.f32 %v808, %v872
  %v876 = vmul.f32 %v812, %v870
  %v877 = vmul.f32 %v812, %v871
  %v878 = vmul.f32 %v812, %v872
  %v879 = vmul.f32 %v816, %v870
  %v880 = vmul.f32 %v816, %v871
  %v881 = vmul.f32 %v816, %v872
  %v882 = vmul.f32 %v820, %v870
  %v883 = vmul.f32 %v820, %v871
  %v884 = vmul.f32 %v820, %v872
  %v885 = vmul.f32 %v824, %v870
  %v886 = vmul.f32 %v824, %v871
  %v887 = vmul.f32 %v824, %v872
  %v888 = vmul.f32 %v828, %v870
  %v889 = vmul.f32 %v828, %v871
  %v890 = vmul.f32 %v828, %v872
  %v891 = vmul.f32 %v832, %v870
  %v892 = vmul.f32 %v832, %v871
  %v893 = vmul.f32 %v832, %v872
  %v894 = vmul.f32 %v836, %v870
  %v895 = vmul.f32 %v836, %v871
  %v896 = vmul.f32 %v836, %v872
  %v897 = vmul.f32 %v840, %v870
  %v898 = vmul.f32 %v840, %v871
  %v899 = vmul.f32 %v840, %v872
  %v900 = vmul.f32 %v844, %v870
  %v901 = vmul.f32 %v844, %v871
  %v902 = vmul.f32 %v844, %v872
  %v903 = vmul.f32 %v848, %v870
  %v904 = vmul.f32 %v848, %v871
  %v905 = vmul.f32 %v848, %v872
  %v906 = vmul.f32 %v852, %v870
  %v907 = vmul.f32 %v852, %v871
  %v908 = vmul.f32 %v852, %v872
  %v909 = vmul.f32 %v856, %v870
  %v910 = vmul.f32 %v856, %v871
  %v911 = vmul.f32 %v856, %v872
  %v912 = vmul.f32 %v860, %v870
  %v913 = vmul.f32 %v860, %v871
  %v914 = vmul.f32 %v860, %v872
  %v915 = vmul.f32 %v864, %v870
  %v916 = vmul.f32 %v864, %v871
  %v917 = vmul.f32 %v864, %v872
  %v918 = vmul.f32 %v868, %v870
  %v919 = vmul.f32 %v868, %v871
  %v920 = vmul.f32 %v868, %v872
  %v921 = vadd.f32 %v758, %v873
  %v922 = vadd.f32 %v759, %v874
  %v923 = vadd.f32 %v760, %v875
  %v924 = vadd.f32 %v761, %v876
  %v925 = vadd.f32 %v762, %v877
  %v926 = vadd.f32 %v763, %v878
  %v927 = vadd.f32 %v764, %v879
  %v928 = vadd.f32 %v765, %v880
  %v929 = vadd.f32 %v766, %v881
  %v930 = vadd.f32 %v767, %v882
  %v931 = vadd.f32 %v768, %v883
  %v932 = vadd.f32 %v769, %v884
  %v933 = vadd.f32 %v770, %v885
  %v934 = vadd.f32 %v771, %v886
  %v935 = vadd.f32 %v772, %v887
  %v936 = vadd.f32 %v773, %v888
  %v937 = vadd.f32 %v774, %v889
  %v938 = vadd.f32 %v775, %v890
  %v939 = vadd.f32 %v776, %v891
  %v940 = vadd.f32 %v777, %v892
  %v941 = vadd.f32 %v778, %v893
  %v942 = vadd.f32 %v779, %v894
  %v943 = vadd.f32 %v780, %v895
  %v944 = vadd.f32 %v781, %v896
  %v945 = vadd.f32 %v782, %v897
  %v946 = vadd.f32 %v783, %v898
  %v947 = vadd.f32 %v784, %v899
  %v948 = vadd.f32 %v785, %v900
  %v949 = vadd.f32 %v786, %v901
  %v950 = vadd.f32 %v787, %v902
  %v951 = vadd.f32 %v788, %v903
  %v952 = vadd.f32 %v789, %v904
  %v953 = vadd.f32 %v790, %v905
  %v954 = vadd.f32 %v791, %v906
  %v955 = vadd.f32 %v792, %v907
  %v956 = vadd.f32 %v793, %v908
  %v957 = vadd.f32 %v794, %v909
  %v958 = vadd.f32 %v795, %v910
  %v959 = vadd.f32 %v796, %v911
  %v960 = vadd.f32 %v797, %v912
  %v961 = vadd.f32 %v798, %v913
  %v962 = vadd.f32 %v799, %v914
  %v963 = vadd.f32 %v800, %v915
  %v964 = vadd.f32 %v801, %v916
  %v965 = vadd.f32 %v802, %v917
  %v966 = vadd.f32 %v803, %v918
  %v967 = vadd.f32 %v804, %v919
  %v968 = vadd.f32 %v805, %v920
  %969 = vset.pattern.permute.xlu0 5
  %970 = vperm.xlu0 %969, %v26
  %v971 = vpop.permute.xlu0 %970
  %973 = vset.pattern.permute.xlu0 5
  %974 = vperm.xlu0 %973, %v27
  %v975 = vpop.permute.xlu0 %974
  %977 = vset.pattern.permute.xlu0 5
  %978 = vperm.xlu0 %977, %v28
  %v979 = vpop.permute.xlu0 %978
  %981 = vset.pattern.permute.xlu0 5
  %982 = vperm.xlu0 %981, %v29
  %v983 = vpop.permute.xlu0 %982
  %985 = vset.pattern.permute.xlu0 5
  %986 = vperm.xlu0 %985, %v30
  %v987 = vpop.permute.xlu0 %986
  %989 = vset.pattern.permute.xlu0 5
  %990 = vperm.xlu0 %989, %v31
  %v991 = vpop.permute.xlu0 %990
  %993 = vset.pattern.permute.xlu0 5
  %994 = vperm.xlu0 %993, %v32
  %v995 = vpop.permute.xlu0 %994
  %997 = vset.pattern.permute.xlu0 5
  %998 = vperm.xlu0 %997, %v33
  %v999 = vpop.permute.xlu0 %998
  %1001 = vset.pattern.permute.xlu0 5
  %1002 = vperm.xlu0 %1001, %v34
  %v1003 = vpop.permute.xlu0 %1002
  %1005 = vset.pattern.permute.xlu0 5
  %1006 = vperm.xlu0 %1005, %v35
  %v1007 = vpop.permute.xlu0 %1006
  %1009 = vset.pattern.permute.xlu0 5
  %1010 = vperm.xlu0 %1009, %v36
  %v1011 = vpop.permute.xlu0 %1010
  %1013 = vset.pattern.permute.xlu0 5
  %1014 = vperm.xlu0 %1013, %v37
  %v1015 = vpop.permute.xlu0 %1014
  %1017 = vset.pattern.permute.xlu0 5
  %1018 = vperm.xlu0 %1017, %v38
  %v1019 = vpop.permute.xlu0 %1018
  %1021 = vset.pattern.permute.xlu0 5
  %1022 = vperm.xlu0 %1021, %v39
  %v1023 = vpop.permute.xlu0 %1022
  %1025 = vset.pattern.permute.xlu0 5
  %1026 = vperm.xlu0 %1025, %v40
  %v1027 = vpop.permute.xlu0 %1026
  %1029 = vset.pattern.permute.xlu0 5
  %1030 = vperm.xlu0 %1029, %v41
  %v1031 = vpop.permute.xlu0 %1030
  %v1033 = vperm.slane %v20, 5
  %v1034 = vperm.slane %v21, 5
  %v1035 = vperm.slane %v22, 5
  %v1036 = vmul.f32 %v971, %v1033
  %v1037 = vmul.f32 %v971, %v1034
  %v1038 = vmul.f32 %v971, %v1035
  %v1039 = vmul.f32 %v975, %v1033
  %v1040 = vmul.f32 %v975, %v1034
  %v1041 = vmul.f32 %v975, %v1035
  %v1042 = vmul.f32 %v979, %v1033
  %v1043 = vmul.f32 %v979, %v1034
  %v1044 = vmul.f32 %v979, %v1035
  %v1045 = vmul.f32 %v983, %v1033
  %v1046 = vmul.f32 %v983, %v1034
  %v1047 = vmul.f32 %v983, %v1035
  %v1048 = vmul.f32 %v987, %v1033
  %v1049 = vmul.f32 %v987, %v1034
  %v1050 = vmul.f32 %v987, %v1035
  %v1051 = vmul.f32 %v991, %v1033
  %v1052 = vmul.f32 %v991, %v1034
  %v1053 = vmul.f32 %v991, %v1035
  %v1054 = vmul.f32 %v995, %v1033
  %v1055 = vmul.f32 %v995, %v1034
  %v1056 = vmul.f32 %v995, %v1035
  %v1057 = vmul.f32 %v999, %v1033
  %v1058 = vmul.f32 %v999, %v1034
  %v1059 = vmul.f32 %v999, %v1035
  %v1060 = vmul.f32 %v1003, %v1033
  %v1061 = vmul.f32 %v1003, %v1034
  %v1062 = vmul.f32 %v1003, %v1035
  %v1063 = vmul.f32 %v1007, %v1033
  %v1064 = vmul.f32 %v1007, %v1034
  %v1065 = vmul.f32 %v1007, %v1035
  %v1066 = vmul.f32 %v1011, %v1033
  %v1067 = vmul.f32 %v1011, %v1034
  %v1068 = vmul.f32 %v1011, %v1035
  %v1069 = vmul.f32 %v1015, %v1033
  %v1070 = vmul.f32 %v1015, %v1034
  %v1071 = vmul.f32 %v1015, %v1035
  %v1072 = vmul.f32 %v1019, %v1033
  %v1073 = vmul.f32 %v1019, %v1034
  %v1074 = vmul.f32 %v1019, %v1035
  %v1075 = vmul.f32 %v1023, %v1033
  %v1076 = vmul.f32 %v1023, %v1034
  %v1077 = vmul.f32 %v1023, %v1035
  %v1078 = vmul.f32 %v1027, %v1033
  %v1079 = vmul.f32 %v1027, %v1034
  %v1080 = vmul.f32 %v1027, %v1035
  %v1081 = vmul.f32 %v1031, %v1033
  %v1082 = vmul.f32 %v1031, %v1034
  %v1083 = vmul.f32 %v1031, %v1035
  %v1084 = vadd.f32 %v921, %v1036
  %v1085 = vadd.f32 %v922, %v1037
  %v1086 = vadd.f32 %v923, %v1038
  %v1087 = vadd.f32 %v924, %v1039
  %v1088 = vadd.f32 %v925, %v1040
  %v1089 = vadd.f32 %v926, %v1041
  %v1090 = vadd.f32 %v927, %v1042
  %v1091 = vadd.f32 %v928, %v1043
  %v1092 = vadd.f32 %v929, %v1044
  %v1093 = vadd.f32 %v930, %v1045
  %v1094 = vadd.f32 %v931, %v1046
  %v1095 = vadd.f32 %v932, %v1047
  %v1096 = vadd.f32 %v933, %v1048
  %v1097 = vadd.f32 %v934, %v1049
  %v1098 = vadd.f32 %v935, %v1050
  %v1099 = vadd.f32 %v936, %v1051
  %v1100 = vadd.f32 %v937, %v1052
  %v1101 = vadd.f32 %v938, %v1053
  %v1102 = vadd.f32 %v939, %v1054
  %v1103 = vadd.f32 %v940, %v1055
  %v1104 = vadd.f32 %v941, %v1056
  %v1105 = vadd.f32 %v942, %v1057
  %v1106 = vadd.f32 %v943, %v1058
  %v1107 = vadd.f32 %v944, %v1059
  %v1108 = vadd.f32 %v945, %v1060
  %v1109 = vadd.f32 %v946, %v1061
  %v1110 = vadd.f32 %v947, %v1062
  %v1111 = vadd.f32 %v948, %v1063
  %v1112 = vadd.f32 %v949, %v1064
  %v1113 = vadd.f32 %v950, %v1065
  %v1114 = vadd.f32 %v951, %v1066
  %v1115 = vadd.f32 %v952, %v1067
  %v1116 = vadd.f32 %v953, %v1068
  %v1117 = vadd.f32 %v954, %v1069
  %v1118 = vadd.f32 %v955, %v1070
  %v1119 = vadd.f32 %v956, %v1071
  %v1120 = vadd.f32 %v957, %v1072
  %v1121 = vadd.f32 %v958, %v1073
  %v1122 = vadd.f32 %v959, %v1074
  %v1123 = vadd.f32 %v960, %v1075
  %v1124 = vadd.f32 %v961, %v1076
  %v1125 = vadd.f32 %v962, %v1077
  %v1126 = vadd.f32 %v963, %v1078
  %v1127 = vadd.f32 %v964, %v1079
  %v1128 = vadd.f32 %v965, %v1080
  %v1129 = vadd.f32 %v966, %v1081
  %v1130 = vadd.f32 %v967, %v1082
  %v1131 = vadd.f32 %v968, %v1083
  %1132 = vset.pattern.permute.xlu0 6
  %1133 = vperm.xlu0 %1132, %v26
  %v1134 = vpop.permute.xlu0 %1133
  %1136 = vset.pattern.permute.xlu0 6
  %1137 = vperm.xlu0 %1136, %v27
  %v1138 = vpop.permute.xlu0 %1137
  %1140 = vset.pattern.permute.xlu0 6
  %1141 = vperm.xlu0 %1140, %v28
  %v1142 = vpop.permute.xlu0 %1141
  %1144 = vset.pattern.permute.xlu0 6
  %1145 = vperm.xlu0 %1144, %v29
  %v1146 = vpop.permute.xlu0 %1145
  %1148 = vset.pattern.permute.xlu0 6
  %1149 = vperm.xlu0 %1148, %v30
  %v1150 = vpop.permute.xlu0 %1149
  %1152 = vset.pattern.permute.xlu0 6
  %1153 = vperm.xlu0 %1152, %v31
  %v1154 = vpop.permute.xlu0 %1153
  %1156 = vset.pattern.permute.xlu0 6
  %1157 = vperm.xlu0 %1156, %v32
  %v1158 = vpop.permute.xlu0 %1157
  %1160 = vset.pattern.permute.xlu0 6
  %1161 = vperm.xlu0 %1160, %v33
  %v1162 = vpop.permute.xlu0 %1161
  %1164 = vset.pattern.permute.xlu0 6
  %1165 = vperm.xlu0 %1164, %v34
  %v1166 = vpop.permute.xlu0 %1165
  %1168 = vset.pattern.permute.xlu0 6
  %1169 = vperm.xlu0 %1168, %v35
  %v1170 = vpop.permute.xlu0 %1169
  %1172 = vset.pattern.permute.xlu0 6
  %1173 = vperm.xlu0 %1172, %v36
  %v1174 = vpop.permute.xlu0 %1173
  %1176 = vset.pattern.permute.xlu0 6
  %1177 = vperm.xlu0 %1176, %v37
  %v1178 = vpop.permute.xlu0 %1177
  %1180 = vset.pattern.permute.xlu0 6
  %1181 = vperm.xlu0 %1180, %v38
  %v1182 = vpop.permute.xlu0 %1181
  %1184 = vset.pattern.permute.xlu0 6
  %1185 = vperm.xlu0 %1184, %v39
  %v1186 = vpop.permute.xlu0 %1185
  %1188 = vset.pattern.permute.xlu0 6
  %1189 = vperm.xlu0 %1188, %v40
  %v1190 = vpop.permute.xlu0 %1189
  %1192 = vset.pattern.permute.xlu0 6
  %1193 = vperm.xlu0 %1192, %v41
  %v1194 = vpop.permute.xlu0 %1193
  %v1196 = vperm.slane %v20, 6
  %v1197 = vperm.slane %v21, 6
  %v1198 = vperm.slane %v22, 6
  %v1199 = vmul.f32 %v1134, %v1196
  %v1200 = vmul.f32 %v1134, %v1197
  %v1201 = vmul.f32 %v1134, %v1198
  %v1202 = vmul.f32 %v1138, %v1196
  %v1203 = vmul.f32 %v1138, %v1197
  %v1204 = vmul.f32 %v1138, %v1198
  %v1205 = vmul.f32 %v1142, %v1196
  %v1206 = vmul.f32 %v1142, %v1197
  %v1207 = vmul.f32 %v1142, %v1198
  %v1208 = vmul.f32 %v1146, %v1196
  %v1209 = vmul.f32 %v1146, %v1197
  %v1210 = vmul.f32 %v1146, %v1198
  %v1211 = vmul.f32 %v1150, %v1196
  %v1212 = vmul.f32 %v1150, %v1197
  %v1213 = vmul.f32 %v1150, %v1198
  %v1214 = vmul.f32 %v1154, %v1196
  %v1215 = vmul.f32 %v1154, %v1197
  %v1216 = vmul.f32 %v1154, %v1198
  %v1217 = vmul.f32 %v1158, %v1196
  %v1218 = vmul.f32 %v1158, %v1197
  %v1219 = vmul.f32 %v1158, %v1198
  %v1220 = vmul.f32 %v1162, %v1196
  %v1221 = vmul.f32 %v1162, %v1197
  %v1222 = vmul.f32 %v1162, %v1198
  %v1223 = vmul.f32 %v1166, %v1196
  %v1224 = vmul.f32 %v1166, %v1197
  %v1225 = vmul.f32 %v1166, %v1198
  %v1226 = vmul.f32 %v1170, %v1196
  %v1227 = vmul.f32 %v1170, %v1197
  %v1228 = vmul.f32 %v1170, %v1198
  %v1229 = vmul.f32 %v1174, %v1196
  %v1230 = vmul.f32 %v1174, %v1197
  %v1231 = vmul.f32 %v1174, %v1198
  %v1232 = vmul.f32 %v1178, %v1196
  %v1233 = vmul.f32 %v1178, %v1197
  %v1234 = vmul.f32 %v1178, %v1198
  %v1235 = vmul.f32 %v1182, %v1196
  %v1236 = vmul.f32 %v1182, %v1197
  %v1237 = vmul.f32 %v1182, %v1198
  %v1238 = vmul.f32 %v1186, %v1196
  %v1239 = vmul.f32 %v1186, %v1197
  %v1240 = vmul.f32 %v1186, %v1198
  %v1241 = vmul.f32 %v1190, %v1196
  %v1242 = vmul.f32 %v1190, %v1197
  %v1243 = vmul.f32 %v1190, %v1198
  %v1244 = vmul.f32 %v1194, %v1196
  %v1245 = vmul.f32 %v1194, %v1197
  %v1246 = vmul.f32 %v1194, %v1198
  %v1247 = vadd.f32 %v1084, %v1199
  %v1248 = vadd.f32 %v1085, %v1200
  %v1249 = vadd.f32 %v1086, %v1201
  %v1250 = vadd.f32 %v1087, %v1202
  %v1251 = vadd.f32 %v1088, %v1203
  %v1252 = vadd.f32 %v1089, %v1204
  %v1253 = vadd.f32 %v1090, %v1205
  %v1254 = vadd.f32 %v1091, %v1206
  %v1255 = vadd.f32 %v1092, %v1207
  %v1256 = vadd.f32 %v1093, %v1208
  %v1257 = vadd.f32 %v1094, %v1209
  %v1258 = vadd.f32 %v1095, %v1210
  %v1259 = vadd.f32 %v1096, %v1211
  %v1260 = vadd.f32 %v1097, %v1212
  %v1261 = vadd.f32 %v1098, %v1213
  %v1262 = vadd.f32 %v1099, %v1214
  %v1263 = vadd.f32 %v1100, %v1215
  %v1264 = vadd.f32 %v1101, %v1216
  %v1265 = vadd.f32 %v1102, %v1217
  %v1266 = vadd.f32 %v1103, %v1218
  %v1267 = vadd.f32 %v1104, %v1219
  %v1268 = vadd.f32 %v1105, %v1220
  %v1269 = vadd.f32 %v1106, %v1221
  %v1270 = vadd.f32 %v1107, %v1222
  %v1271 = vadd.f32 %v1108, %v1223
  %v1272 = vadd.f32 %v1109, %v1224
  %v1273 = vadd.f32 %v1110, %v1225
  %v1274 = vadd.f32 %v1111, %v1226
  %v1275 = vadd.f32 %v1112, %v1227
  %v1276 = vadd.f32 %v1113, %v1228
  %v1277 = vadd.f32 %v1114, %v1229
  %v1278 = vadd.f32 %v1115, %v1230
  %v1279 = vadd.f32 %v1116, %v1231
  %v1280 = vadd.f32 %v1117, %v1232
  %v1281 = vadd.f32 %v1118, %v1233
  %v1282 = vadd.f32 %v1119, %v1234
  %v1283 = vadd.f32 %v1120, %v1235
  %v1284 = vadd.f32 %v1121, %v1236
  %v1285 = vadd.f32 %v1122, %v1237
  %v1286 = vadd.f32 %v1123, %v1238
  %v1287 = vadd.f32 %v1124, %v1239
  %v1288 = vadd.f32 %v1125, %v1240
  %v1289 = vadd.f32 %v1126, %v1241
  %v1290 = vadd.f32 %v1127, %v1242
  %v1291 = vadd.f32 %v1128, %v1243
  %v1292 = vadd.f32 %v1129, %v1244
  %v1293 = vadd.f32 %v1130, %v1245
  %v1294 = vadd.f32 %v1131, %v1246
  %1295 = vset.pattern.permute.xlu0 7
  %1296 = vperm.xlu0 %1295, %v26
  %v1297 = vpop.permute.xlu0 %1296
  %1299 = vset.pattern.permute.xlu0 7
  %1300 = vperm.xlu0 %1299, %v27
  %v1301 = vpop.permute.xlu0 %1300
  %1303 = vset.pattern.permute.xlu0 7
  %1304 = vperm.xlu0 %1303, %v28
  %v1305 = vpop.permute.xlu0 %1304
  %1307 = vset.pattern.permute.xlu0 7
  %1308 = vperm.xlu0 %1307, %v29
  %v1309 = vpop.permute.xlu0 %1308
  %1311 = vset.pattern.permute.xlu0 7
  %1312 = vperm.xlu0 %1311, %v30
  %v1313 = vpop.permute.xlu0 %1312
  %1315 = vset.pattern.permute.xlu0 7
  %1316 = vperm.xlu0 %1315, %v31
  %v1317 = vpop.permute.xlu0 %1316
  %1319 = vset.pattern.permute.xlu0 7
  %1320 = vperm.xlu0 %1319, %v32
  %v1321 = vpop.permute.xlu0 %1320
  %1323 = vset.pattern.permute.xlu0 7
  %1324 = vperm.xlu0 %1323, %v33
  %v1325 = vpop.permute.xlu0 %1324
  %1327 = vset.pattern.permute.xlu0 7
  %1328 = vperm.xlu0 %1327, %v34
  %v1329 = vpop.permute.xlu0 %1328
  %1331 = vset.pattern.permute.xlu0 7
  %1332 = vperm.xlu0 %1331, %v35
  %v1333 = vpop.permute.xlu0 %1332
  %1335 = vset.pattern.permute.xlu0 7
  %1336 = vperm.xlu0 %1335, %v36
  %v1337 = vpop.permute.xlu0 %1336
  %1339 = vset.pattern.permute.xlu0 7
  %1340 = vperm.xlu0 %1339, %v37
  %v1341 = vpop.permute.xlu0 %1340
  %1343 = vset.pattern.permute.xlu0 7
  %1344 = vperm.xlu0 %1343, %v38
  %v1345 = vpop.permute.xlu0 %1344
  %1347 = vset.pattern.permute.xlu0 7
  %1348 = vperm.xlu0 %1347, %v39
  %v1349 = vpop.permute.xlu0 %1348
  %1351 = vset.pattern.permute.xlu0 7
  %1352 = vperm.xlu0 %1351, %v40
  %v1353 = vpop.permute.xlu0 %1352
  %1355 = vset.pattern.permute.xlu0 7
  %1356 = vperm.xlu0 %1355, %v41
  %v1357 = vpop.permute.xlu0 %1356
  %v1359 = vperm.slane %v20, 7
  %v1360 = vperm.slane %v21, 7
  %v1361 = vperm.slane %v22, 7
  %v1362 = vmul.f32 %v1297, %v1359
  %v1363 = vmul.f32 %v1297, %v1360
  %v1364 = vmul.f32 %v1297, %v1361
  %v1365 = vmul.f32 %v1301, %v1359
  %v1366 = vmul.f32 %v1301, %v1360
  %v1367 = vmul.f32 %v1301, %v1361
  %v1368 = vmul.f32 %v1305, %v1359
  %v1369 = vmul.f32 %v1305, %v1360
  %v1370 = vmul.f32 %v1305, %v1361
  %v1371 = vmul.f32 %v1309, %v1359
  %v1372 = vmul.f32 %v1309, %v1360
  %v1373 = vmul.f32 %v1309, %v1361
  %v1374 = vmul.f32 %v1313, %v1359
  %v1375 = vmul.f32 %v1313, %v1360
  %v1376 = vmul.f32 %v1313, %v1361
  %v1377 = vmul.f32 %v1317, %v1359
  %v1378 = vmul.f32 %v1317, %v1360
  %v1379 = vmul.f32 %v1317, %v1361
  %v1380 = vmul.f32 %v1321, %v1359
  %v1381 = vmul.f32 %v1321, %v1360
  %v1382 = vmul.f32 %v1321, %v1361
  %v1383 = vmul.f32 %v1325, %v1359
  %v1384 = vmul.f32 %v1325, %v1360
  %v1385 = vmul.f32 %v1325, %v1361
  %v1386 = vmul.f32 %v1329, %v1359
  %v1387 = vmul.f32 %v1329, %v1360
  %v1388 = vmul.f32 %v1329, %v1361
  %v1389 = vmul.f32 %v1333, %v1359
  %v1390 = vmul.f32 %v1333, %v1360
  %v1391 = vmul.f32 %v1333, %v1361
  %v1392 = vmul.f32 %v1337, %v1359
  %v1393 = vmul.f32 %v1337, %v1360
  %v1394 = vmul.f32 %v1337, %v1361
  %v1395 = vmul.f32 %v1341, %v1359
  %v1396 = vmul.f32 %v1341, %v1360
  %v1397 = vmul.f32 %v1341, %v1361
  %v1398 = vmul.f32 %v1345, %v1359
  %v1399 = vmul.f32 %v1345, %v1360
  %v1400 = vmul.f32 %v1345, %v1361
  %v1401 = vmul.f32 %v1349, %v1359
  %v1402 = vmul.f32 %v1349, %v1360
  %v1403 = vmul.f32 %v1349, %v1361
  %v1404 = vmul.f32 %v1353, %v1359
  %v1405 = vmul.f32 %v1353, %v1360
  %v1406 = vmul.f32 %v1353, %v1361
  %v1407 = vmul.f32 %v1357, %v1359
  %v1408 = vmul.f32 %v1357, %v1360
  %v1409 = vmul.f32 %v1357, %v1361
  %v1410 = vadd.f32 %v1247, %v1362
  %v1411 = vadd.f32 %v1248, %v1363
  %v1412 = vadd.f32 %v1249, %v1364
  %v1413 = vadd.f32 %v1250, %v1365
  %v1414 = vadd.f32 %v1251, %v1366
  %v1415 = vadd.f32 %v1252, %v1367
  %v1416 = vadd.f32 %v1253, %v1368
  %v1417 = vadd.f32 %v1254, %v1369
  %v1418 = vadd.f32 %v1255, %v1370
  %v1419 = vadd.f32 %v1256, %v1371
  %v1420 = vadd.f32 %v1257, %v1372
  %v1421 = vadd.f32 %v1258, %v1373
  %v1422 = vadd.f32 %v1259, %v1374
  %v1423 = vadd.f32 %v1260, %v1375
  %v1424 = vadd.f32 %v1261, %v1376
  %v1425 = vadd.f32 %v1262, %v1377
  %v1426 = vadd.f32 %v1263, %v1378
  %v1427 = vadd.f32 %v1264, %v1379
  %v1428 = vadd.f32 %v1265, %v1380
  %v1429 = vadd.f32 %v1266, %v1381
  %v1430 = vadd.f32 %v1267, %v1382
  %v1431 = vadd.f32 %v1268, %v1383
  %v1432 = vadd.f32 %v1269, %v1384
  %v1433 = vadd.f32 %v1270, %v1385
  %v1434 = vadd.f32 %v1271, %v1386
  %v1435 = vadd.f32 %v1272, %v1387
  %v1436 = vadd.f32 %v1273, %v1388
  %v1437 = vadd.f32 %v1274, %v1389
  %v1438 = vadd.f32 %v1275, %v1390
  %v1439 = vadd.f32 %v1276, %v1391
  %v1440 = vadd.f32 %v1277, %v1392
  %v1441 = vadd.f32 %v1278, %v1393
  %v1442 = vadd.f32 %v1279, %v1394
  %v1443 = vadd.f32 %v1280, %v1395
  %v1444 = vadd.f32 %v1281, %v1396
  %v1445 = vadd.f32 %v1282, %v1397
  %v1446 = vadd.f32 %v1283, %v1398
  %v1447 = vadd.f32 %v1284, %v1399
  %v1448 = vadd.f32 %v1285, %v1400
  %v1449 = vadd.f32 %v1286, %v1401
  %v1450 = vadd.f32 %v1287, %v1402
  %v1451 = vadd.f32 %v1288, %v1403
  %v1452 = vadd.f32 %v1289, %v1404
  %v1453 = vadd.f32 %v1290, %v1405
  %v1454 = vadd.f32 %v1291, %v1406
  %v1455 = vadd.f32 %v1292, %v1407
  %v1456 = vadd.f32 %v1293, %v1408
  %v1457 = vadd.f32 %v1294, %v1409
  %1458 = vset.pattern.permute.xlu0 8
  %1459 = vperm.xlu0 %1458, %v26
  %v1460 = vpop.permute.xlu0 %1459
  %1462 = vset.pattern.permute.xlu0 8
  %1463 = vperm.xlu0 %1462, %v27
  %v1464 = vpop.permute.xlu0 %1463
  %1466 = vset.pattern.permute.xlu0 8
  %1467 = vperm.xlu0 %1466, %v28
  %v1468 = vpop.permute.xlu0 %1467
  %1470 = vset.pattern.permute.xlu0 8
  %1471 = vperm.xlu0 %1470, %v29
  %v1472 = vpop.permute.xlu0 %1471
  %1474 = vset.pattern.permute.xlu0 8
  %1475 = vperm.xlu0 %1474, %v30
  %v1476 = vpop.permute.xlu0 %1475
  %1478 = vset.pattern.permute.xlu0 8
  %1479 = vperm.xlu0 %1478, %v31
  %v1480 = vpop.permute.xlu0 %1479
  %1482 = vset.pattern.permute.xlu0 8
  %1483 = vperm.xlu0 %1482, %v32
  %v1484 = vpop.permute.xlu0 %1483
  %1486 = vset.pattern.permute.xlu0 8
  %1487 = vperm.xlu0 %1486, %v33
  %v1488 = vpop.permute.xlu0 %1487
  %1490 = vset.pattern.permute.xlu0 8
  %1491 = vperm.xlu0 %1490, %v34
  %v1492 = vpop.permute.xlu0 %1491
  %1494 = vset.pattern.permute.xlu0 8
  %1495 = vperm.xlu0 %1494, %v35
  %v1496 = vpop.permute.xlu0 %1495
  %1498 = vset.pattern.permute.xlu0 8
  %1499 = vperm.xlu0 %1498, %v36
  %v1500 = vpop.permute.xlu0 %1499
  %1502 = vset.pattern.permute.xlu0 8
  %1503 = vperm.xlu0 %1502, %v37
  %v1504 = vpop.permute.xlu0 %1503
  %1506 = vset.pattern.permute.xlu0 8
  %1507 = vperm.xlu0 %1506, %v38
  %v1508 = vpop.permute.xlu0 %1507
  %1510 = vset.pattern.permute.xlu0 8
  %1511 = vperm.xlu0 %1510, %v39
  %v1512 = vpop.permute.xlu0 %1511
  %1514 = vset.pattern.permute.xlu0 8
  %1515 = vperm.xlu0 %1514, %v40
  %v1516 = vpop.permute.xlu0 %1515
  %1518 = vset.pattern.permute.xlu0 8
  %1519 = vperm.xlu0 %1518, %v41
  %v1520 = vpop.permute.xlu0 %1519
  %v1522 = vperm.slane %v23, 0
  %v1523 = vperm.slane %v24, 0
  %v1524 = vperm.slane %v25, 0
  %v1525 = vmul.f32 %v1460, %v1522
  %v1526 = vmul.f32 %v1460, %v1523
  %v1527 = vmul.f32 %v1460, %v1524
  %v1528 = vmul.f32 %v1464, %v1522
  %v1529 = vmul.f32 %v1464, %v1523
  %v1530 = vmul.f32 %v1464, %v1524
  %v1531 = vmul.f32 %v1468, %v1522
  %v1532 = vmul.f32 %v1468, %v1523
  %v1533 = vmul.f32 %v1468, %v1524
  %v1534 = vmul.f32 %v1472, %v1522
  %v1535 = vmul.f32 %v1472, %v1523
  %v1536 = vmul.f32 %v1472, %v1524
  %v1537 = vmul.f32 %v1476, %v1522
  %v1538 = vmul.f32 %v1476, %v1523
  %v1539 = vmul.f32 %v1476, %v1524
  %v1540 = vmul.f32 %v1480, %v1522
  %v1541 = vmul.f32 %v1480, %v1523
  %v1542 = vmul.f32 %v1480, %v1524
  %v1543 = vmul.f32 %v1484, %v1522
  %v1544 = vmul.f32 %v1484, %v1523
  %v1545 = vmul.f32 %v1484, %v1524
  %v1546 = vmul.f32 %v1488, %v1522
  %v1547 = vmul.f32 %v1488, %v1523
  %v1548 = vmul.f32 %v1488, %v1524
  %v1549 = vmul.f32 %v1492, %v1522
  %v1550 = vmul.f32 %v1492, %v1523
  %v1551 = vmul.f32 %v1492, %v1524
  %v1552 = vmul.f32 %v1496, %v1522
  %v1553 = vmul.f32 %v1496, %v1523
  %v1554 = vmul.f32 %v1496, %v1524
  %v1555 = vmul.f32 %v1500, %v1522
  %v1556 = vmul.f32 %v1500, %v1523
  %v1557 = vmul.f32 %v1500, %v1524
  %v1558 = vmul.f32 %v1504, %v1522
  %v1559 = vmul.f32 %v1504, %v1523
  %v1560 = vmul.f32 %v1504, %v1524
  %v1561 = vmul.f32 %v1508, %v1522
  %v1562 = vmul.f32 %v1508, %v1523
  %v1563 = vmul.f32 %v1508, %v1524
  %v1564 = vmul.f32 %v1512, %v1522
  %v1565 = vmul.f32 %v1512, %v1523
  %v1566 = vmul.f32 %v1512, %v1524
  %v1567 = vmul.f32 %v1516, %v1522
  %v1568 = vmul.f32 %v1516, %v1523
  %v1569 = vmul.f32 %v1516, %v1524
  %v1570 = vmul.f32 %v1520, %v1522
  %v1571 = vmul.f32 %v1520, %v1523
  %v1572 = vmul.f32 %v1520, %v1524
  %v1573 = vadd.f32 %v1410, %v1525
  %v1574 = vadd.f32 %v1411, %v1526
  %v1575 = vadd.f32 %v1412, %v1527
  %v1576 = vadd.f32 %v1413, %v1528
  %v1577 = vadd.f32 %v1414, %v1529
  %v1578 = vadd.f32 %v1415, %v1530
  %v1579 = vadd.f32 %v1416, %v1531
  %v1580 = vadd.f32 %v1417, %v1532
  %v1581 = vadd.f32 %v1418, %v1533
  %v1582 = vadd.f32 %v1419, %v1534
  %v1583 = vadd.f32 %v1420, %v1535
  %v1584 = vadd.f32 %v1421, %v1536
  %v1585 = vadd.f32 %v1422, %v1537
  %v1586 = vadd.f32 %v1423, %v1538
  %v1587 = vadd.f32 %v1424, %v1539
  %v1588 = vadd.f32 %v1425, %v1540
  %v1589 = vadd.f32 %v1426, %v1541
  %v1590 = vadd.f32 %v1427, %v1542
  %v1591 = vadd.f32 %v1428, %v1543
  %v1592 = vadd.f32 %v1429, %v1544
  %v1593 = vadd.f32 %v1430, %v1545
  %v1594 = vadd.f32 %v1431, %v1546
  %v1595 = vadd.f32 %v1432, %v1547
  %v1596 = vadd.f32 %v1433, %v1548
  %v1597 = vadd.f32 %v1434, %v1549
  %v1598 = vadd.f32 %v1435, %v1550
  %v1599 = vadd.f32 %v1436, %v1551
  %v1600 = vadd.f32 %v1437, %v1552
  %v1601 = vadd.f32 %v1438, %v1553
  %v1602 = vadd.f32 %v1439, %v1554
  %v1603 = vadd.f32 %v1440, %v1555
  %v1604 = vadd.f32 %v1441, %v1556
  %v1605 = vadd.f32 %v1442, %v1557
  %v1606 = vadd.f32 %v1443, %v1558
  %v1607 = vadd.f32 %v1444, %v1559
  %v1608 = vadd.f32 %v1445, %v1560
  %v1609 = vadd.f32 %v1446, %v1561
  %v1610 = vadd.f32 %v1447, %v1562
  %v1611 = vadd.f32 %v1448, %v1563
  %v1612 = vadd.f32 %v1449, %v1564
  %v1613 = vadd.f32 %v1450, %v1565
  %v1614 = vadd.f32 %v1451, %v1566
  %v1615 = vadd.f32 %v1452, %v1567
  %v1616 = vadd.f32 %v1453, %v1568
  %v1617 = vadd.f32 %v1454, %v1569
  %v1618 = vadd.f32 %v1455, %v1570
  %v1619 = vadd.f32 %v1456, %v1571
  %v1620 = vadd.f32 %v1457, %v1572
  %v1621 = vmax.f32 %v1573, 0.0
  %v1622 = vmax.f32 %v1574, 0.0
  %v1623 = vmax.f32 %v1575, 0.0
  %v1624 = vmax.f32 %v1576, 0.0
  %v1625 = vmax.f32 %v1577, 0.0
  %v1626 = vmax.f32 %v1578, 0.0
  %v1627 = vmax.f32 %v1579, 0.0
  %v1628 = vmax.f32 %v1580, 0.0
  %v1629 = vmax.f32 %v1581, 0.0
  %v1630 = vmax.f32 %v1582, 0.0
  %v1631 = vmax.f32 %v1583, 0.0
  %v1632 = vmax.f32 %v1584, 0.0
  %v1633 = vmax.f32 %v1585, 0.0
  %v1634 = vmax.f32 %v1586, 0.0
  %v1635 = vmax.f32 %v1587, 0.0
  %v1636 = vmax.f32 %v1588, 0.0
  %v1637 = vmax.f32 %v1589, 0.0
  %v1638 = vmax.f32 %v1590, 0.0
  %v1639 = vmax.f32 %v1591, 0.0
  %v1640 = vmax.f32 %v1592, 0.0
  %v1641 = vmax.f32 %v1593, 0.0
  %v1642 = vmax.f32 %v1594, 0.0
  %v1643 = vmax.f32 %v1595, 0.0
  %v1644 = vmax.f32 %v1596, 0.0
  %v1645 = vmax.f32 %v1597, 0.0
  %v1646 = vmax.f32 %v1598, 0.0
  %v1647 = vmax.f32 %v1599, 0.0
  %v1648 = vmax.f32 %v1600, 0.0
  %v1649 = vmax.f32 %v1601, 0.0
  %v1650 = vmax.f32 %v1602, 0.0
  %v1651 = vmax.f32 %v1603, 0.0
  %v1652 = vmax.f32 %v1604, 0.0
  %v1653 = vmax.f32 %v1605, 0.0
  %v1654 = vmax.f32 %v1606, 0.0
  %v1655 = vmax.f32 %v1607, 0.0
  %v1656 = vmax.f32 %v1608, 0.0
  %v1657 = vmax.f32 %v1609, 0.0
  %v1658 = vmax.f32 %v1610, 0.0
  %v1659 = vmax.f32 %v1611, 0.0
  %v1660 = vmax.f32 %v1612, 0.0
  %v1661 = vmax.f32 %v1613, 0.0
  %v1662 = vmax.f32 %v1614, 0.0
  %v1663 = vmax.f32 %v1615, 0.0
  %v1664 = vmax.f32 %v1616, 0.0
  %v1665 = vmax.f32 %v1617, 0.0
  %v1666 = vmax.f32 %v1618, 0.0
  %v1667 = vmax.f32 %v1619, 0.0
  %v1668 = vmax.f32 %v1620, 0.0
  %v1669 = vld [vmem:[%s3] sm:$0xff]
  %v1670 = vld [vmem:[%s4] sm:$0xff]
  %1672 = vset.pattern.permute.xlu0 0
  %1673 = vperm.xlu0 %1672, %v1670
  %v1674 = vpop.permute.xlu0 %1673
  %1676 = vmatpush.msra.mxu0 %v1666
  %1677 = vmatpush.msra.mxu0 %v1663
  %1678 = vmatpush.msra.mxu0 %v1660
  %1679 = vmatpush.msra.mxu0 %v1657
  %1680 = vmatpush.msra.mxu0 %v1654
  %1681 = vmatpush.msra.mxu0 %v1651
  %1682 = vmatpush.msra.mxu0 %v1648
  %1683 = vmatpush.msra.mxu0 %v1645
  %1684 = vmatpush.msra.mxu0 %v1642
  %1685 = vmatpush.msra.mxu0 %v1639
  %1686 = vmatpush.msra.mxu0 %v1636
  %1687 = vmatpush.msra.mxu0 %v1633
  %1688 = vmatpush.msra.mxu0 %v1630
  %1689 = vmatpush.msra.mxu0 %v1627
  %1690 = vmatpush.msra.mxu0 %v1624
  %1691 = vmatpush.msra.mxu0 %v1621
  %1692 = vmatmul.f32.gmra.mxu0 %v1669
  %v1693 = vpop.f32.mrf.mxu0
  %v1694 = vadd.f32 %v1674, %v1693
  %1695 = vdwg.mxu0
  %1696 = vmatpush.msra.mxu0 %v1667
  %1697 = vmatpush.msra.mxu0 %v1664
  %1698 = vmatpush.msra.mxu0 %v1661
  %1699 = vmatpush.msra.mxu0 %v1658
  %1700 = vmatpush.msra.mxu0 %v1655
  %1701 = vmatpush.msra.mxu0 %v1652
  %1702 = vmatpush.msra.mxu0 %v1649
  %1703 = vmatpush.msra.mxu0 %v1646
  %1704 = vmatpush.msra.mxu0 %v1643
  %1705 = vmatpush.msra.mxu0 %v1640
  %1706 = vmatpush.msra.mxu0 %v1637
  %1707 = vmatpush.msra.mxu0 %v1634
  %1708 = vmatpush.msra.mxu0 %v1631
  %1709 = vmatpush.msra.mxu0 %v1628
  %1710 = vmatpush.msra.mxu0 %v1625
  %1711 = vmatpush.msra.mxu0 %v1622
  %1712 = vmatmul.f32.gmra.mxu0 %v1669
  %v1713 = vpop.f32.mrf.mxu0
  %v1714 = vadd.f32 %v1674, %v1713
  %1715 = vdwg.mxu0
  %1716 = vmatpush.msra.mxu0 %v1668
  %1717 = vmatpush.msra.mxu0 %v1665
  %1718 = vmatpush.msra.mxu0 %v1662
  %1719 = vmatpush.msra.mxu0 %v1659
  %1720 = vmatpush.msra.mxu0 %v1656
  %1721 = vmatpush.msra.mxu0 %v1653
  %1722 = vmatpush.msra.mxu0 %v1650
  %1723 = vmatpush.msra.mxu0 %v1647
  %1724 = vmatpush.msra.mxu0 %v1644
  %1725 = vmatpush.msra.mxu0 %v1641
  %1726 = vmatpush.msra.mxu0 %v1638
  %1727 = vmatpush.msra.mxu0 %v1635
  %1728 = vmatpush.msra.mxu0 %v1632
  %1729 = vmatpush.msra.mxu0 %v1629
  %1730 = vmatpush.msra.mxu0 %v1626
  %1731 = vmatpush.msra.mxu0 %v1623
  %1732 = vmatmul.f32.gmra.mxu0 %v1669
  %v1733 = vpop.f32.mrf.mxu0
  %v1734 = vadd.f32 %v1674, %v1733
  %1735 = vdwg.mxu0
  %1736 = vst [vmem:[%s5] sm:$0xff] %v1694
  %1737 = vst [vmem:[%s5 + $0x8] sm:$0xff] %v1714
  %1738 = vst [vmem:[%s5 + $0x10] sm:$0xff] %v1734
  // Predicated region
  $region22: #{net_forward.1} parent=0 // pred_check
    _
  $region23: #{net_forward.1} parent=0 // pred_check_branch
    %1740 = sbr.rel (0) target = $region25
  $region24: #{net_forward.1} parent=0 // pred_region
    _
  $region25: #{net_forward.1} parent=0 // pred_fallthru
    _
  // Predicated region
  $region26: #{net_forward.1} parent=0 // pred_check
    _
  $region27: #{net_forward.1} parent=0 // pred_check_branch
    %1742 = sbr.rel (0) target = $region29
  $region28: #{net_forward.1} parent=0 // pred_region
    _
  $region29: #{net_forward.1} parent=0 // pred_fallthru
    _

</llo_original>
